<compile_context>
chip_gen: v5e
topology: v5e:2x2
jax: 0.10.0
libtpu: 0.0.40
codegen_flags: <defaults>
</compile_context>

<pallas_src>
import numpy as np
import jax
import jax.numpy as jnp
from jax.experimental import pallas as pl
from jax.experimental.pallas import tpu as pltpu


# ----------------------------- parameter glue -----------------------------

def _bn_fold(gamma, beta, mean, var, eps=1e-5):
    s = gamma / np.sqrt(var + eps)
    t = beta - mean * s
    return s.astype(np.float32), t.astype(np.float32)


def _upsample_matrix(l_in, l_out):
    # 1-D bilinear interpolation matrix, align_corners=True (matches F.upsample).
    u = np.zeros((l_out, l_in), np.float32)
    if l_in == 1:
        u[:, 0] = 1.0
        return u
    for i in range(l_out):
        src = i * (l_in - 1) / (l_out - 1)
        i0 = int(np.floor(src))
        i1 = min(i0 + 1, l_in - 1)
        f = src - i0
        u[i, i0] += 1.0 - f
        u[i, i1] += f
    return u


def _conv3x3_s2_p1_matrix(w3, H, W):
    # Dense conv-as-matrix for Conv2d(1, 1, 3, stride=2, padding=1): (Hout*Wout, H*W).
    Hout = (H - 1) // 2 + 1
    Wout = (W - 1) // 2 + 1
    m = np.zeros((Hout * Wout, H * W), np.float32)
    for i in range(Hout):
        for j in range(Wout):
            for di in range(3):
                for dj in range(3):
                    r = 2 * i + di - 1
                    c = 2 * j + dj - 1
                    if 0 <= r < H and 0 <= c < W:
                        m[i * Wout + j, r * W + c] += w3[di, dj]
    return m


def init_params(key, C, H, W, reduction=16):
    assert C % reduction == 0
    Cmid = C // reduction
    keys = iter(jax.random.split(key, 32))

    def nrm(shape, s=0.3):
        return np.asarray(s * jax.random.normal(next(keys), shape, jnp.float32))

    def bn(n):
        gamma = np.asarray(0.5 + jax.random.uniform(next(keys), (n,), jnp.float32))
        beta = nrm((n,), 0.1)
        mean = nrm((n,), 0.1)
        var = np.asarray(0.5 + jax.random.uniform(next(keys), (n,), jnp.float32))
        return _bn_fold(gamma, beta, mean, var)

    # --- SpatialAttn: ConvBlock(1,1,3,s=2,p=1) then ConvBlock(1,1,1) ---
    w_s1 = nrm((3, 3)); b_s1 = nrm(()); s1s, s1t = bn(1)
    w_s2 = nrm(());     b_s2 = nrm(()); s2s, s2t = bn(1)

    # --- ChannelAttn: 1x1 convs C -> C//r -> C ---
    w_c1 = nrm((C, Cmid)); b_c1 = nrm((Cmid,)); c1s, c1t = bn(Cmid)
    w_c2 = nrm((Cmid, C)); b_c2 = nrm((C,));    c2s, c2t = bn(C)

    # --- final ConvBlock(C, C, 1) ---
    w_f = nrm((C, C)); b_f = nrm((C,)); fs, ft = bn(C)

    Hout = (H - 1) // 2 + 1
    Wout = (W - 1) // 2 + 1
    uh = _upsample_matrix(Hout, 2 * Hout)   # (H, Hout)
    uw = _upsample_matrix(Wout, 2 * Wout)   # (W, Wout)

    scalars = np.array(
        [b_s1, s1s[0], s1t[0], w_s2, b_s2, s2s[0], s2t[0], 0.0], np.float32)

    params = dict(
        w_s1=w_s1, uh=uh, uw=uw,
        scalars=jnp.asarray(scalars),
        w_c1=jnp.asarray(w_c1),
        p_c1=jnp.asarray(np.stack([b_c1, c1s, c1t], 0)),    # (3, Cmid)
        w_c2=jnp.asarray(w_c2),
        p_c2=jnp.asarray(np.stack([b_c2, c2s, c2t], 0)),    # (3, C)
        w_f=jnp.asarray(w_f),
        p_f=jnp.asarray(np.stack([b_f, fs, ft], 0)),        # (3, C)
    )
    return params, Hout, Wout


# ----------------------- per-chip grid / batch policy -----------------------

def _device_kind():
    try:
        return jax.devices()[0].device_kind.lower()
    except Exception:
        return ""


def _pick_block_n(N, per_image_bytes, tile_budget_bytes, want_steps):
    """Largest per-step batch B (divisor of N) giving >= want_steps grid steps
    while keeping double-buffered in/out tiles + f32 temporaries within budget."""
    b_max = max(1, tile_budget_bytes // max(per_image_bytes, 1))
    steps = min(want_steps, N)
    while steps <= N:
        if N % steps == 0 and N // steps <= b_max:
            return N // steps
        steps += 1
    return 1


# ------------------------------ Pallas kernel ------------------------------

def harm_attn(x_nchw, params, block_n=None, out_dtype=jnp.bfloat16):
    N, C, H, W = x_nchw.shape
    HW = H * W
    uh, uw, w_s1 = params["uh"], params["uw"], params["w_s1"]
    Hout, Wout = uh.shape[1], uw.shape[1]
    assert 2 * Hout == H and 2 * Wout == W
    HW4 = Hout * Wout

    # Dense, lane-dense spatial weights (conv3x3/s2 and bilinear x2 as matmuls).
    # TODO(synk): for large HW fall back to the factored row/col-tap conv and the
    # separable Uh/Uw upsample; dense is strictly better up to a few-K HW.
    assert 2 * HW * HW4 * 4 <= 16 * 1024 * 1024, "HW too large for the dense path"

    sc = params["scalars"]      # [b_s1, s1_s, s1_t, w_s2, b_s2, s2_s, s2_t, 0]
    M = jnp.asarray(_conv3x3_s2_p1_matrix(w_s1, H, W))       # (HW/4, HW)
    U = jnp.asarray(np.kron(uh, uw))                         # (HW, HW/4)
    mt = (M * sc[1]).T                                       # (HW, HW/4)  BN scale folded
    ut = (U * (sc[3] * sc[5])).T                             # (HW/4, HW)  1x1 conv * BN scale folded
    sp_b = jnp.stack([sc[0] * sc[1] + sc[2],                 # folded conv bias
                      sc[4] * sc[5] + sc[6]])                # folded 1x1 bias  -> SMEM (2,)

    # Channel branch + final block, BN folded into weights/biases (exact algebra).
    p1, p2, pf = params["p_c1"], params["p_c2"], params["p_f"]
    wc1 = params["w_c1"] * p1[1][None, :]                    # (C, Cmid)
    pb1 = (p1[0] * p1[1] + p1[2])[None, :]                   # (1, Cmid)
    wc2 = params["w_c2"] * p2[1][None, :]                    # (Cmid, C)
    wff = params["w_f"] * pf[1][None, :]                     # (C, C)  final BN scale folded
    pcf = jnp.stack([p2[0] * p2[1] + p2[2],                  # (2, C): [y_ch bias, final folded bias]
                     pf[0] * pf[1] + pf[2]])

    # Per-chip policy: 1 grid step on single-TC chips (v5e/v6e), 2 parallel steps
    # on v7x (2 TCs, 64 MiB VMEM); B sized from a VMEM budget, not a fixed list.
    kind = _device_kind()
    is_v7 = ("v7" in kind) or ("7x" in kind)
    has_bf16_vpu = is_v7 or ("v6" in kind)
    vmem_cap = (64 if is_v7 else 128) * 1024 * 1024
    want_steps = 2 if is_v7 else 1

    in_item = jnp.dtype(x_nchw.dtype).itemsize
    out_item = jnp.dtype(out_dtype).itemsize
    per_image = C * HW * (2 * (in_item + out_item)   # double-buffered in/out tiles
                          + 2 * 4)                   # f32-ish temporaries in the tail
    B = _pick_block_n(N, per_image, int(vmem_cap * 0.75), want_steps) \
        if block_n is None else block_n
    assert N % B == 0
    grid = (N // B,)
    vmem_limit = min(int(vmem_cap * 0.75), max(32 * 1024 * 1024, 4 * B * per_image))

    # NCHW kept end-to-end (lane axis = HW); native input dtype, upcast in-kernel.
    x = x_nchw.reshape(N, C, HW)
    compute_dt = jnp.bfloat16 if has_bf16_vpu else jnp.float32

    def kernel(x_ref, mt_ref, ut_ref, wc1_ref, wc2_ref, wff_ref,
               pb1_ref, pcf_ref, sc_ref, o_ref):
        xb = x_ref[...].astype(jnp.float32)                  # (B, C, HW)

        # ---- Spatial attention: channel mean -> conv3x3/s2 -> x2 upsample ----
        s = jnp.sum(xb, axis=1) * (1.0 / C)                  # (B, HW)   lane-dense
        h = jnp.dot(s, mt_ref[...], preferred_element_type=jnp.float32) + sc_ref[0]
        h = jnp.maximum(h, 0.0)                              # (B, HW/4)
        y_sp = jnp.dot(h, ut_ref[...], preferred_element_type=jnp.float32) + sc_ref[1]
        y_sp = jnp.maximum(y_sp, 0.0)                        # (B, HW)

        # ---- Channel attention: global avg pool -> C -> C/r -> C ----
        g = jnp.sum(xb, axis=2) * (1.0 / HW)                 # (B, C)
        h1 = jnp.dot(g, wc1_ref[...], preferred_element_type=jnp.float32) + pb1_ref[0]
        h1 = jnp.maximum(h1, 0.0)                            # (B, Cmid)
        y_ch = jnp.dot(h1, wc2_ref[...], preferred_element_type=jnp.float32) + pcf_ref[0]
        y_ch = jnp.maximum(y_ch, 0.0)                        # (B, C)

        # ---- final ConvBlock(C,C,1) + sigmoid: rank-1 refactor of the 1x1 conv.
        # y[b,c,p] = y_ch[b,c]*y_sp[b,p] is rank-1, so conv+BN collapses to
        # a[b,c]*y_sp[b,p] + d[c] with a = y_ch @ (w_f * fs) and d = b_f*fs + ft.
        a = jnp.dot(y_ch, wff_ref[...], preferred_element_type=jnp.float32)   # (B, C)
        d = pcf_ref[1]                                       # (C,)
        # Bulk elementwise tail in bf16 on chips with bf16 VPU/EUP (v6e/v7x).
        z = (a.astype(compute_dt)[:, :, None] * y_sp.astype(compute_dt)[:, None, :]
             + d.astype(compute_dt)[None, :, None])
        z = jnp.maximum(z, 0.0)
        o_ref[...] = jax.nn.sigmoid(z).astype(o_ref.dtype)   # (B, C, HW) lane-dense store

    def full(arr):
        nd = arr.ndim
        return pl.BlockSpec(arr.shape, lambda b, _nd=nd: (0,) * _nd)

    # NOTE: the constant-index weight inputs stay default double-buffered
    # (~0.3 MiB total incl. both buffers); pl.Buffered(1) intentionally omitted.
    out = pl.pallas_call(
        kernel,
        out_shape=jax.ShapeDtypeStruct((N, C, HW), out_dtype),
        grid=grid,
        in_specs=[
            pl.BlockSpec((B, C, HW), lambda b: (b, 0, 0)),
            full(mt), full(ut), full(wc1), full(wc2), full(wff),
            full(pb1), full(pcf),
            pl.BlockSpec(memory_space=pltpu.MemorySpace.SMEM),
        ],
        out_specs=pl.BlockSpec((B, C, HW), lambda b: (b, 0, 0)),
        compiler_params=pltpu.CompilerParams(
            dimension_semantics=("parallel",),
            vmem_limit_bytes=vmem_limit),
    )(x, mt, ut, wc1, wc2, wff, pb1, pcf, sp_b)

    return out.reshape(N, C, H, W)                           # free reshape (NCHW kept)


# ---------------------------- pure-JAX reference ----------------------------

def harm_attn_ref(x_nchw, params):
    N, C, H, W = x_nchw.shape
    M = jnp.asarray(_conv3x3_s2_p1_matrix(params["w_s1"], H, W))
    U = jnp.asarray(np.kron(params["uh"], params["uw"]))
    x = jnp.transpose(x_nchw, (0, 2, 3, 1)).astype(jnp.float32).reshape(N, H * W, C)
    sc = params["scalars"]
    s = jnp.mean(x, axis=2, keepdims=True)
    h = jnp.einsum("oi,nip->nop", M, s) + sc[0]
    h = jnp.maximum(h * sc[1] + sc[2], 0.0)
    u = jnp.einsum("oi,nip->nop", U, h)
    u = u * sc[3] + sc[4]
    y_sp = jnp.maximum(u * sc[5] + sc[6], 0.0)
    g = jnp.mean(x, axis=1, keepdims=True)
    p1, p2, pf = params["p_c1"], params["p_c2"], params["p_f"]
    h1 = jnp.maximum((g @ params["w_c1"] + p1[0]) * p1[1] + p1[2], 0.0)
    y_ch = jnp.maximum((h1 @ params["w_c2"] + p2[0]) * p2[1] + p2[2], 0.0)
    y = y_sp * y_ch
    z = jnp.maximum((y @ params["w_f"] + pf[0]) * pf[1] + pf[2], 0.0)
    z = jax.nn.sigmoid(z)
    return jnp.transpose(z.reshape(N, H, W, C), (0, 3, 1, 2))


if __name__ == "__main__":
    key = jax.random.PRNGKey(0)
    N, C, H, W = 4, 32, 16, 16          # C divisible by reduction_rate=16
    kx, kp = jax.random.split(key)
    x = jax.random.normal(kx, (N, C, H, W), jnp.float32)

    params, Hout, Wout = init_params(kp, C, H, W)
    assert 2 * Hout == H and 2 * Wout == W

    out = harm_attn(x, params)          # grid=(1,) on v5e/v6e, (2,) on v7x
    out = jax.block_until_ready(out)
    assert out.shape == (N, C, H, W)

    ref = harm_attn_ref(x, params)
    np.testing.assert_allclose(np.asarray(out.astype(jnp.float32)),
                               np.asarray(ref), atol=1e-2, rtol=1e-2)

    print("KERNEL_OK")
</pallas_src>

<mosaic_0001>
module attributes {stable_mosaic.version = 11 : i64} {
  func.func @kernel(%arg0: i32, %arg1: memref<4x32x256xf32, #tpu.memory_space<vmem>>, %arg2: memref<256x64xf32, #tpu.memory_space<vmem>>, %arg3: memref<64x256xf32, #tpu.memory_space<vmem>>, %arg4: memref<32x2xf32, #tpu.memory_space<vmem>>, %arg5: memref<2x32xf32, #tpu.memory_space<vmem>>, %arg6: memref<32x32xf32, #tpu.memory_space<vmem>>, %arg7: memref<1x2xf32, #tpu.memory_space<vmem>>, %arg8: memref<2x32xf32, #tpu.memory_space<vmem>>, %arg9: memref<2xf32, #tpu.memory_space<smem>>, %arg10: memref<4x32x256xbf16, #tpu.memory_space<vmem>>) attributes {dimension_semantics = [#tpu.dimension_semantics<parallel>], iteration_bounds = array<i64: 1>, scalar_prefetch = 0 : i64, scratch_operands = 0 : i64, tpu.core_type = #tpu.core_type<tc>, window_params = [{transform_indices = @transform_0, window_bounds = array<i64: 4, 32, 256>}, {pipeline_mode = #tpu.pipeline_mode<synchronous>, transform_indices = @transform_1, window_bounds = array<i64: 256, 64>}, {pipeline_mode = #tpu.pipeline_mode<synchronous>, transform_indices = @transform_2, window_bounds = array<i64: 64, 256>}, {pipeline_mode = #tpu.pipeline_mode<synchronous>, transform_indices = @transform_3, window_bounds = array<i64: 32, 2>}, {pipeline_mode = #tpu.pipeline_mode<synchronous>, transform_indices = @transform_4, window_bounds = array<i64: 2, 32>}, {pipeline_mode = #tpu.pipeline_mode<synchronous>, transform_indices = @transform_5, window_bounds = array<i64: 32, 32>}, {pipeline_mode = #tpu.pipeline_mode<synchronous>, transform_indices = @transform_6, window_bounds = array<i64: 1, 2>}, {pipeline_mode = #tpu.pipeline_mode<synchronous>, transform_indices = @transform_7, window_bounds = array<i64: 2, 32>}, {transform_indices = @transform_8, window_bounds = array<i64: 2>}, {transform_indices = @transform_9, window_bounds = array<i64: 4, 32, 256>}]} {
    %c0 = arith.constant 0 : index
    %c0_0 = arith.constant 0 : index
    %c0_1 = arith.constant 0 : index
    %0 = vector.load %arg1[%c0, %c0_0, %c0_1] : memref<4x32x256xf32, #tpu.memory_space<vmem>>, vector<4x32x256xf32>
    %cst = arith.constant dense<0.000000e+00> : vector<4x256xf32>
    %1 = vector.multi_reduction <add>, %0, %cst [1] : vector<4x32x256xf32> to vector<4x256xf32>
    %cst_2 = arith.constant 3.125000e-02 : f32
    %2 = vector.broadcast %cst_2 : f32 to vector<4x256xf32>
    %3 = arith.mulf %1, %2 : vector<4x256xf32>
    %c0_3 = arith.constant 0 : index
    %c0_4 = arith.constant 0 : index
    %4 = vector.load %arg2[%c0_3, %c0_4] : memref<256x64xf32, #tpu.memory_space<vmem>>, vector<256x64xf32>
    %cst_5 = arith.constant dense<0.000000e+00> : vector<4x64xf32>
    %5 = tpu.matmul %3, %4, %cst_5 {dimension_numbers = #tpu.dot_dimension_numbers<[1], [0], [0], [1], [0, 0, 1, 1], [], []>} : vector<4x256xf32>, vector<256x64xf32>, vector<4x64xf32> -> vector<4x64xf32>
    %c0_6 = arith.constant 0 : index
    %6 = memref.load %arg9[%c0_6] : memref<2xf32, #tpu.memory_space<smem>>
    %7 = vector.broadcast %6 : f32 to vector<4x64xf32>
    %8 = arith.addf %5, %7 : vector<4x64xf32>
    %cst_7 = arith.constant 0.000000e+00 : f32
    %9 = vector.broadcast %cst_7 : f32 to vector<4x64xf32>
    %10 = arith.maximumf %8, %9 : vector<4x64xf32>
    %c0_8 = arith.constant 0 : index
    %c0_9 = arith.constant 0 : index
    %11 = vector.load %arg3[%c0_8, %c0_9] : memref<64x256xf32, #tpu.memory_space<vmem>>, vector<64x256xf32>
    %cst_10 = arith.constant dense<0.000000e+00> : vector<4x256xf32>
    %12 = tpu.matmul %10, %11, %cst_10 {dimension_numbers = #tpu.dot_dimension_numbers<[1], [0], [0], [1], [0, 0, 1, 1], [], []>} : vector<4x64xf32>, vector<64x256xf32>, vector<4x256xf32> -> vector<4x256xf32>
    %c1 = arith.constant 1 : index
    %13 = memref.load %arg9[%c1] : memref<2xf32, #tpu.memory_space<smem>>
    %14 = vector.broadcast %13 : f32 to vector<4x256xf32>
    %15 = arith.addf %12, %14 : vector<4x256xf32>
    %cst_11 = arith.constant 0.000000e+00 : f32
    %16 = vector.broadcast %cst_11 : f32 to vector<4x256xf32>
    %17 = arith.maximumf %15, %16 : vector<4x256xf32>
    %cst_12 = arith.constant dense<0.000000e+00> : vector<4x32xf32>
    %18 = vector.multi_reduction <add>, %0, %cst_12 [2] : vector<4x32x256xf32> to vector<4x32xf32>
    %cst_13 = arith.constant 3.906250e-03 : f32
    %19 = vector.broadcast %cst_13 : f32 to vector<4x32xf32>
    %20 = arith.mulf %18, %19 : vector<4x32xf32>
    %c0_14 = arith.constant 0 : index
    %c0_15 = arith.constant 0 : index
    %21 = vector.load %arg4[%c0_14, %c0_15] : memref<32x2xf32, #tpu.memory_space<vmem>>, vector<32x2xf32>
    %cst_16 = arith.constant dense<0.000000e+00> : vector<4x2xf32>
    %22 = tpu.matmul %20, %21, %cst_16 {dimension_numbers = #tpu.dot_dimension_numbers<[1], [0], [0], [1], [0, 0, 1, 1], [], []>} : vector<4x32xf32>, vector<32x2xf32>, vector<4x2xf32> -> vector<4x2xf32>
    %c0_17 = arith.constant 0 : index
    %c0_18 = arith.constant 0 : index
    %23 = vector.load %arg7[%c0_17, %c0_18] : memref<1x2xf32, #tpu.memory_space<vmem>>, vector<1x2xf32>
    %24 = vector.shape_cast %23 : vector<1x2xf32> to vector<2xf32>
    %25 = vector.shape_cast %24 : vector<2xf32> to vector<1x2xf32>
    %26 = vector.broadcast %25 : vector<1x2xf32> to vector<4x2xf32>
    %27 = arith.addf %22, %26 : vector<4x2xf32>
    %cst_19 = arith.constant 0.000000e+00 : f32
    %28 = vector.broadcast %cst_19 : f32 to vector<4x2xf32>
    %29 = arith.maximumf %27, %28 : vector<4x2xf32>
    %c0_20 = arith.constant 0 : index
    %c0_21 = arith.constant 0 : index
    %30 = vector.load %arg5[%c0_20, %c0_21] : memref<2x32xf32, #tpu.memory_space<vmem>>, vector<2x32xf32>
    %cst_22 = arith.constant dense<0.000000e+00> : vector<4x32xf32>
    %31 = tpu.matmul %29, %30, %cst_22 {dimension_numbers = #tpu.dot_dimension_numbers<[1], [0], [0], [1], [0, 0, 1, 1], [], []>} : vector<4x2xf32>, vector<2x32xf32>, vector<4x32xf32> -> vector<4x32xf32>
    %c0_23 = arith.constant 0 : index
    %c0_24 = arith.constant 0 : index
    %32 = vector.load %arg8[%c0_23, %c0_24] : memref<2x32xf32, #tpu.memory_space<vmem>>, vector<1x32xf32>
    %33 = vector.shape_cast %32 : vector<1x32xf32> to vector<32xf32>
    %34 = vector.shape_cast %33 : vector<32xf32> to vector<1x32xf32>
    %35 = vector.broadcast %34 : vector<1x32xf32> to vector<4x32xf32>
    %36 = arith.addf %31, %35 : vector<4x32xf32>
    %cst_25 = arith.constant 0.000000e+00 : f32
    %37 = vector.broadcast %cst_25 : f32 to vector<4x32xf32>
    %38 = arith.maximumf %36, %37 : vector<4x32xf32>
    %c0_26 = arith.constant 0 : index
    %c0_27 = arith.constant 0 : index
    %39 = vector.load %arg6[%c0_26, %c0_27] : memref<32x32xf32, #tpu.memory_space<vmem>>, vector<32x32xf32>
    %cst_28 = arith.constant dense<0.000000e+00> : vector<4x32xf32>
    %40 = tpu.matmul %38, %39, %cst_28 {dimension_numbers = #tpu.dot_dimension_numbers<[1], [0], [0], [1], [0, 0, 1, 1], [], []>} : vector<4x32xf32>, vector<32x32xf32>, vector<4x32xf32> -> vector<4x32xf32>
    %c1_29 = arith.constant 1 : index
    %c0_30 = arith.constant 0 : index
    %41 = vector.load %arg8[%c1_29, %c0_30] : memref<2x32xf32, #tpu.memory_space<vmem>>, vector<1x32xf32>
    %42 = vector.shape_cast %41 : vector<1x32xf32> to vector<32xf32>
    %43 = vector.shape_cast %40 : vector<4x32xf32> to vector<4x32x1xf32>
    %44 = vector.shape_cast %17 : vector<4x256xf32> to vector<4x1x256xf32>
    %45 = vector.broadcast %43 : vector<4x32x1xf32> to vector<4x32x256xf32>
    %46 = vector.broadcast %44 : vector<4x1x256xf32> to vector<4x32x256xf32>
    %47 = arith.mulf %45, %46 : vector<4x32x256xf32>
    %48 = vector.shape_cast %42 : vector<32xf32> to vector<1x32x1xf32>
    %49 = vector.broadcast %48 : vector<1x32x1xf32> to vector<4x32x256xf32>
    %50 = arith.addf %47, %49 : vector<4x32x256xf32>
    %cst_31 = arith.constant 0.000000e+00 : f32
    %51 = vector.broadcast %cst_31 : f32 to vector<4x32x256xf32>
    %52 = arith.maximumf %50, %51 : vector<4x32x256xf32>
    %53 = arith.negf %52 : vector<4x32x256xf32>
    %54 = math.exp %53 : vector<4x32x256xf32>
    %cst_32 = arith.constant 1.000000e+00 : f32
    %55 = vector.broadcast %cst_32 : f32 to vector<4x32x256xf32>
    %56 = arith.addf %55, %54 : vector<4x32x256xf32>
    %57 = arith.divf %55, %56 : vector<4x32x256xf32>
    %58 = arith.truncf %57 : vector<4x32x256xf32> to vector<4x32x256xbf16>
    %c0_33 = arith.constant 0 : index
    %c0_34 = arith.constant 0 : index
    %c0_35 = arith.constant 0 : index
    %59 = vector.load %arg10[%c0_33, %c0_34, %c0_35] : memref<4x32x256xbf16, #tpu.memory_space<vmem>>, vector<4x32x256xbf16>
    tpu.vector_store %arg10[%c0_33, %c0_34, %c0_35], %58 {strides = array<i32>} : memref<4x32x256xbf16, #tpu.memory_space<vmem>>, vector<4x32x256xbf16>,
    return
  }
  func.func @transform_0(%arg0: i32) -> (i32, i32, i32) {
    %c0_i32 = arith.constant 0 : i32
    %c0_i32_0 = arith.constant 0 : i32
    %c0_i32_1 = arith.constant 0 : i32
    return %arg0, %c0_i32, %c0_i32_0 : i32, i32, i32
  }
  func.func @transform_1(%arg0: i32) -> (i32, i32) {
    %c0_i32 = arith.constant 0 : i32
    %c0_i32_0 = arith.constant 0 : i32
    %c0_i32_1 = arith.constant 0 : i32
    return %c0_i32, %c0_i32_0 : i32, i32
  }
  func.func @transform_2(%arg0: i32) -> (i32, i32) {
    %c0_i32 = arith.constant 0 : i32
    %c0_i32_0 = arith.constant 0 : i32
    %c0_i32_1 = arith.constant 0 : i32
    return %c0_i32, %c0_i32_0 : i32, i32
  }
  func.func @transform_3(%arg0: i32) -> (i32, i32) {
    %c0_i32 = arith.constant 0 : i32
    %c0_i32_0 = arith.constant 0 : i32
    %c0_i32_1 = arith.constant 0 : i32
    return %c0_i32, %c0_i32_0 : i32, i32
  }
  func.func @transform_4(%arg0: i32) -> (i32, i32) {
    %c0_i32 = arith.constant 0 : i32
    %c0_i32_0 = arith.constant 0 : i32
    %c0_i32_1 = arith.constant 0 : i32
    return %c0_i32, %c0_i32_0 : i32, i32
  }
  func.func @transform_5(%arg0: i32) -> (i32, i32) {
    %c0_i32 = arith.constant 0 : i32
    %c0_i32_0 = arith.constant 0 : i32
    %c0_i32_1 = arith.constant 0 : i32
    return %c0_i32, %c0_i32_0 : i32, i32
  }
  func.func @transform_6(%arg0: i32) -> (i32, i32) {
    %c0_i32 = arith.constant 0 : i32
    %c0_i32_0 = arith.constant 0 : i32
    %c0_i32_1 = arith.constant 0 : i32
    return %c0_i32, %c0_i32_0 : i32, i32
  }
  func.func @transform_7(%arg0: i32) -> (i32, i32) {
    %c0_i32 = arith.constant 0 : i32
    %c0_i32_0 = arith.constant 0 : i32
    %c0_i32_1 = arith.constant 0 : i32
    return %c0_i32, %c0_i32_0 : i32, i32
  }
  func.func @transform_8(%arg0: i32) -> i32 {
    %c0_i32 = arith.constant 0 : i32
    %c0_i32_0 = arith.constant 0 : i32
    return %c0_i32 : i32
  }
  func.func @transform_9(%arg0: i32) -> (i32, i32, i32) {
    %c0_i32 = arith.constant 0 : i32
    %c0_i32_0 = arith.constant 0 : i32
    %c0_i32_1 = arith.constant 0 : i32
    return %arg0, %c0_i32, %c0_i32_0 : i32, i32, i32
  }
}

</mosaic_0001>

<llo_original>
// kernel: tpu_custom_call.1
$region0: #{tpu_custom_call.1}
  #allocation0 [shape = 'u32[]', space=smem, size = 0x4, offset = 0x4, fixed_abs, tag = 'smem constant byte address 0x4 - core index']
  #allocation1 [shape = 'u32[72,128]{1,0:T(1,128)}', space=vmem, size = 0x9000, scoped, tag = 'internal scratch']
  %s0 = inlined_call_operand.vmem [shape: f32[4,32,256], index: 0, kind: input, shape index: {}]
  %s1 = inlined_call_operand.vmem [shape: f32[256,64], index: 1, kind: input, shape index: {}]
  %s2 = inlined_call_operand.vmem [shape: f32[64,256], index: 2, kind: input, shape index: {}]
  %s3 = inlined_call_operand.vmem [shape: f32[32,2], index: 3, kind: input, shape index: {}]
  %s4 = inlined_call_operand.vmem [shape: f32[2,32], index: 4, kind: input, shape index: {}]
  %s5 = inlined_call_operand.vmem [shape: f32[32,32], index: 5, kind: input, shape index: {}]
  %s6 = inlined_call_operand.hbm [shape: f32[1,2], index: 6, kind: input, shape index: {}]
  %s7 = inlined_call_operand.vmem [shape: f32[2,32], index: 7, kind: input, shape index: {}]
  %s8 = inlined_call_operand.hbm [shape: f32[2], index: 8, kind: input, shape index: {}]
  %s9 = inlined_call_operand.hbm [shape: bf16[4,32,256], index: 9, kind: output, shape index: {}]
  %s10 = sld [smem:[#allocation0]]
  $region54: #{tpu_custom_call.1} parent=0
    _
  %s12 = ssub.s32 1, %s10
  %s13 = scalar_select 0, %s12, %s10
  $region1: #{tpu_custom_call.1} parent=0
    #allocation2 [shape = 'u8[512]{0}', space=vmem, size = 0x400, scoped, tag = 'input window, operand 6, single buffered']
    #allocation3 [shape = 's32[1]{0}', space=sflag, size = 0x4, scoped, tag = 'scoped memory for tpu_custom_call.1']
    #allocation4 [shape = 's32[1]{0}', space=sflag, size = 0x4, scoped, tag = 'scoped memory for tpu_custom_call.1']
    #allocation5 [shape = 's32[1]{0}', space=sflag, size = 0x4, scoped, tag = 'scoped memory for tpu_custom_call.1']
    #allocation6 [shape = 'u8[512]{0}', space=smem, size = 0x200, scoped, tag = 'input window, operand 8, single buffered']
    #allocation7 [shape = 'u8[65536]{0}', space=vmem, size = 0x10000, scoped, tag = 'output window, operand 0, single buffered']
    %14 = vsyncpa [#allocation3], 0
    %15 = vsyncpa [#allocation5], 0
    %16 = vsyncpa [#allocation4], 0
    // Predicated region
    $region2: #{tpu_custom_call.1} parent=1 // pred_check
      _
    $region3: #{tpu_custom_call.1} parent=1 // pred_check_branch
      %18 = sbr.rel (0) target = $region5
    $region4: #{tpu_custom_call.1} parent=1 // pred_region
      _
    $region5: #{tpu_custom_call.1} parent=1 // pred_fallthru
      _
    // Predicated region
    $region6: #{tpu_custom_call.1} parent=1 // pred_check
      _
    $region7: #{tpu_custom_call.1} parent=1 // pred_check_branch
      %20 = sbr.rel (0) target = $region9
    $region8: #{tpu_custom_call.1} parent=1 // pred_region
      _
    $region9: #{tpu_custom_call.1} parent=1 // pred_fallthru
      _
    // Predicated region
    $region10: #{tpu_custom_call.1} parent=1 // pred_check
      _
    $region11: #{tpu_custom_call.1} parent=1 // pred_check_branch
      %22 = sbr.rel (0) target = $region13
    $region12: #{tpu_custom_call.1} parent=1 // pred_region
      _
    $region13: #{tpu_custom_call.1} parent=1 // pred_fallthru
      _
    // Predicated region
    $region14: #{tpu_custom_call.1} parent=1 // pred_check
      _
    $region15: #{tpu_custom_call.1} parent=1 // pred_check_branch
      %24 = sbr.rel (0) target = $region17
    $region16: #{tpu_custom_call.1} parent=1 // pred_region
      _
    $region17: #{tpu_custom_call.1} parent=1 // pred_fallthru
      _
    // Predicated region
    $region18: #{tpu_custom_call.1} parent=1 // pred_check
      _
    $region19: #{tpu_custom_call.1} parent=1 // pred_check_branch
      %26 = sbr.rel (0) target = $region21
    $region20: #{tpu_custom_call.1} parent=1 // pred_region
      _
    $region21: #{tpu_custom_call.1} parent=1 // pred_fallthru
      _
    // Predicated region
    $region22: #{tpu_custom_call.1} parent=1 // pred_check
      _
    $region23: #{tpu_custom_call.1} parent=1 // pred_check_branch
      %28 = sbr.rel (0) target = $region25
    $region24: #{tpu_custom_call.1} parent=1 // pred_region
      _
    $region25: #{tpu_custom_call.1} parent=1 // pred_fallthru
      _
    // Predicated region
    $region26: #{tpu_custom_call.1} parent=1 // pred_check
      _
    $region27: #{tpu_custom_call.1} parent=1 // pred_check_branch
      %30 = sbr.rel (0) target = $region29
    $region28: #{tpu_custom_call.1} parent=1 // pred_region
      %32 = vsyncadd [#allocation3], 0
      %s34 = sshll.u32 %s6, 4
      %s35 = int_to_ptr.hbm [resolvable:$true] %s34
      %s36 = sshll.u32 [#allocation2], 4
      %s37 = int_to_ptr.vmem [resolvable:$true] %s36
      %39 = dma.hbm_to_vmem [thread:$0]  %s35, 16, %s37, [#allocation3]
    $region29: #{tpu_custom_call.1} parent=1 // pred_fallthru
      _
    // Predicated region
    $region30: #{tpu_custom_call.1} parent=1 // pred_check
      _
    $region31: #{tpu_custom_call.1} parent=1 // pred_check_branch
      %41 = sbr.rel (0) target = $region33
    $region32: #{tpu_custom_call.1} parent=1 // pred_region
      _
    $region33: #{tpu_custom_call.1} parent=1 // pred_fallthru
      _
    // Predicated region
    $region34: #{tpu_custom_call.1} parent=1 // pred_check
      _
    $region35: #{tpu_custom_call.1} parent=1 // pred_check_branch
      %43 = sbr.rel (0) target = $region37
    $region36: #{tpu_custom_call.1} parent=1 // pred_region
      %45 = vsyncadd [#allocation5], 0
      %s47 = sshll.u32 %s8, 4
      %s48 = int_to_ptr.hbm [resolvable:$true] %s47
      %50 = dma.hbm_to_smem %s48, 16, [#allocation6], [#allocation5]
    $region37: #{tpu_custom_call.1} parent=1 // pred_fallthru
      _
    // Predicated region
    $region38: #{tpu_custom_call.1} parent=1 // pred_check
      _
    $region39: #{tpu_custom_call.1} parent=1 // pred_check_branch
      %52 = sbr.rel (0) target = $region41
    $region40: #{tpu_custom_call.1} parent=1 // pred_region
      %54 = dma.done [#allocation3], 16
    $region41: #{tpu_custom_call.1} parent=1 // pred_fallthru
      _
    // Predicated region
    $region42: #{tpu_custom_call.1} parent=1 // pred_check
      _
    $region43: #{tpu_custom_call.1} parent=1 // pred_check_branch
      %56 = sbr.rel (0) target = $region45
    $region44: #{tpu_custom_call.1} parent=1 // pred_region
      %58 = dma.done [#allocation5], 16
    $region45: #{tpu_custom_call.1} parent=1 // pred_fallthru
      _
    %59 = sfence
    %v60 = vld [vmem:[%s0] sm:$0xff]
    %v61 = vld [vmem:[%s0 + $0x8] sm:$0xff]
    %v62 = vld [vmem:[%s0 + $0x10] sm:$0xff]
    %v63 = vld [vmem:[%s0 + $0x18] sm:$0xff]
    %v64 = vld [vmem:[%s0 + $0x20] sm:$0xff]
    %v65 = vld [vmem:[%s0 + $0x28] sm:$0xff]
    %v66 = vld [vmem:[%s0 + $0x30] sm:$0xff]
    %v67 = vld [vmem:[%s0 + $0x38] sm:$0xff]
    %v68 = vld [vmem:[%s0 + $0x40] sm:$0xff]
    %v69 = vld [vmem:[%s0 + $0x48] sm:$0xff]
    %v70 = vld [vmem:[%s0 + $0x50] sm:$0xff]
    %v71 = vld [vmem:[%s0 + $0x58] sm:$0xff]
    %v72 = vld [vmem:[%s0 + $0x60] sm:$0xff]
    %v73 = vld [vmem:[%s0 + $0x68] sm:$0xff]
    %v74 = vld [vmem:[%s0 + $0x70] sm:$0xff]
    %v75 = vld [vmem:[%s0 + $0x78] sm:$0xff]
    %v76 = vld [vmem:[%s0 + $0x80] sm:$0xff]
    %v77 = vld [vmem:[%s0 + $0x88] sm:$0xff]
    %v78 = vld [vmem:[%s0 + $0x90] sm:$0xff]
    %v79 = vld [vmem:[%s0 + $0x98] sm:$0xff]
    %v80 = vld [vmem:[%s0 + $0xa0] sm:$0xff]
    %v81 = vld [vmem:[%s0 + $0xa8] sm:$0xff]
    %v82 = vld [vmem:[%s0 + $0xb0] sm:$0xff]
    %v83 = vld [vmem:[%s0 + $0xb8] sm:$0xff]
    %v84 = vld [vmem:[%s0 + $0xc0] sm:$0xff]
    %v85 = vld [vmem:[%s0 + $0xc8] sm:$0xff]
    %v86 = vld [vmem:[%s0 + $0xd0] sm:$0xff]
    %v87 = vld [vmem:[%s0 + $0xd8] sm:$0xff]
    %v88 = vld [vmem:[%s0 + $0xe0] sm:$0xff]
    %v89 = vld [vmem:[%s0 + $0xe8] sm:$0xff]
    %v90 = vld [vmem:[%s0 + $0xf0] sm:$0xff]
    %v91 = vld [vmem:[%s0 + $0xf8] sm:$0xff]
    %v92 = vadd.f32 %v60, %v62
    %v93 = vadd.f32 %v92, %v64
    %v94 = vadd.f32 %v93, %v66
    %v95 = vrot.slane %v94, 4
    %v96 = vadd.f32 %v94, %v95
    %v97 = vrot.slane %v96, 2
    %v98 = vadd.f32 %v96, %v97
    %v99 = vrot.slane %v98, 1
    %v100 = vadd.f32 %v98, %v99
    %v101 = vadd.f32 %v61, %v63
    %v102 = vadd.f32 %v101, %v65
    %v103 = vadd.f32 %v102, %v67
    %v104 = vrot.slane %v103, 4
    %v105 = vadd.f32 %v103, %v104
    %v106 = vrot.slane %v105, 2
    %v107 = vadd.f32 %v105, %v106
    %v108 = vrot.slane %v107, 1
    %v109 = vadd.f32 %v107, %v108
    %v110 = vadd.f32 %v68, %v70
    %v111 = vadd.f32 %v110, %v72
    %v112 = vadd.f32 %v111, %v74
    %v113 = vrot.slane %v112, 4
    %v114 = vadd.f32 %v112, %v113
    %v115 = vrot.slane %v114, 2
    %v116 = vadd.f32 %v114, %v115
    %v117 = vrot.slane %v116, 1
    %v118 = vadd.f32 %v116, %v117
    %v119 = vadd.f32 %v69, %v71
    %v120 = vadd.f32 %v119, %v73
    %v121 = vadd.f32 %v120, %v75
    %v122 = vrot.slane %v121, 4
    %v123 = vadd.f32 %v121, %v122
    %v124 = vrot.slane %v123, 2
    %v125 = vadd.f32 %v123, %v124
    %v126 = vrot.slane %v125, 1
    %v127 = vadd.f32 %v125, %v126
    %v128 = vadd.f32 %v76, %v78
    %v129 = vadd.f32 %v128, %v80
    %v130 = vadd.f32 %v129, %v82
    %v131 = vrot.slane %v130, 4
    %v132 = vadd.f32 %v130, %v131
    %v133 = vrot.slane %v132, 2
    %v134 = vadd.f32 %v132, %v133
    %v135 = vrot.slane %v134, 1
    %v136 = vadd.f32 %v134, %v135
    %v137 = vadd.f32 %v77, %v79
    %v138 = vadd.f32 %v137, %v81
    %v139 = vadd.f32 %v138, %v83
    %v140 = vrot.slane %v139, 4
    %v141 = vadd.f32 %v139, %v140
    %v142 = vrot.slane %v141, 2
    %v143 = vadd.f32 %v141, %v142
    %v144 = vrot.slane %v143, 1
    %v145 = vadd.f32 %v143, %v144
    %v146 = vadd.f32 %v84, %v86
    %v147 = vadd.f32 %v146, %v88
    %v148 = vadd.f32 %v147, %v90
    %v149 = vrot.slane %v148, 4
    %v150 = vadd.f32 %v148, %v149
    %v151 = vrot.slane %v150, 2
    %v152 = vadd.f32 %v150, %v151
    %v153 = vrot.slane %v152, 1
    %v154 = vadd.f32 %v152, %v153
    %v155 = vadd.f32 %v85, %v87
    %v156 = vadd.f32 %v155, %v89
    %v157 = vadd.f32 %v156, %v91
    %v158 = vrot.slane %v157, 4
    %v159 = vadd.f32 %v157, %v158
    %v160 = vrot.slane %v159, 2
    %v161 = vadd.f32 %v159, %v160
    %v162 = vrot.slane %v161, 1
    %v163 = vadd.f32 %v161, %v162
    %v164 = vmul.f32 %v100, 0.03125
    %v165 = vmul.f32 %v109, 0.03125
    %v166 = vmul.f32 %v118, 0.03125
    %v167 = vmul.f32 %v127, 0.03125
    %v168 = vmul.f32 %v136, 0.03125
    %v169 = vmul.f32 %v145, 0.03125
    %v170 = vmul.f32 %v154, 0.03125
    %v171 = vmul.f32 %v163, 0.03125
    %v172 = vld [vmem:[%s1] sm:$0xff]
    %v173 = vld [vmem:[%s1 + $0x8] sm:$0xff]
    %v174 = vld [vmem:[%s1 + $0x10] sm:$0xff]
    %v175 = vld [vmem:[%s1 + $0x18] sm:$0xff]
    %v176 = vld [vmem:[%s1 + $0x20] sm:$0xff]
    %v177 = vld [vmem:[%s1 + $0x28] sm:$0xff]
    %v178 = vld [vmem:[%s1 + $0x30] sm:$0xff]
    %v179 = vld [vmem:[%s1 + $0x38] sm:$0xff]
    %v180 = vld [vmem:[%s1 + $0x40] sm:$0xff]
    %v181 = vld [vmem:[%s1 + $0x48] sm:$0xff]
    %v182 = vld [vmem:[%s1 + $0x50] sm:$0xff]
    %v183 = vld [vmem:[%s1 + $0x58] sm:$0xff]
    %v184 = vld [vmem:[%s1 + $0x60] sm:$0xff]
    %v185 = vld [vmem:[%s1 + $0x68] sm:$0xff]
    %v186 = vld [vmem:[%s1 + $0x70] sm:$0xff]
    %v187 = vld [vmem:[%s1 + $0x78] sm:$0xff]
    %v188 = vld [vmem:[%s1 + $0x80] sm:$0xff]
    %v189 = vld [vmem:[%s1 + $0x88] sm:$0xff]
    %v190 = vld [vmem:[%s1 + $0x90] sm:$0xff]
    %v191 = vld [vmem:[%s1 + $0x98] sm:$0xff]
    %v192 = vld [vmem:[%s1 + $0xa0] sm:$0xff]
    %v193 = vld [vmem:[%s1 + $0xa8] sm:$0xff]
    %v194 = vld [vmem:[%s1 + $0xb0] sm:$0xff]
    %v195 = vld [vmem:[%s1 + $0xb8] sm:$0xff]
    %v196 = vld [vmem:[%s1 + $0xc0] sm:$0xff]
    %v197 = vld [vmem:[%s1 + $0xc8] sm:$0xff]
    %v198 = vld [vmem:[%s1 + $0xd0] sm:$0xff]
    %v199 = vld [vmem:[%s1 + $0xd8] sm:$0xff]
    %v200 = vld [vmem:[%s1 + $0xe0] sm:$0xff]
    %v201 = vld [vmem:[%s1 + $0xe8] sm:$0xff]
    %v202 = vld [vmem:[%s1 + $0xf0] sm:$0xff]
    %v203 = vld [vmem:[%s1 + $0xf8] sm:$0xff]
    %s204 = sld [smem:[#allocation6]]
    %v205 = vstv %s204
    %vm214 = vcmask 1041409
    %v215 = vsel %vm214, %v166, %v164
    %vm216 = vcmask 1042434
    %v217 = vsel %vm216, %v168, %v215
    %vm218 = vcmask 1043459
    %v219 = vsel %vm218, %v170, %v217
    %v220 = vsel %vm214, %v167, %v165
    %v221 = vsel %vm216, %v169, %v220
    %v222 = vsel %vm218, %v171, %v221
    %225 = vmatpush.msra.mxu0 %v187
    %226 = vmatpush.msra.mxu0 %v186
    %227 = vmatpush.msra.mxu0 %v185
    %228 = vmatpush.msra.mxu0 %v184
    %229 = vmatpush.msra.mxu0 %v183
    %230 = vmatpush.msra.mxu0 %v182
    %231 = vmatpush.msra.mxu0 %v181
    %232 = vmatpush.msra.mxu0 %v180
    %233 = vmatpush.msra.mxu0 %v179
    %234 = vmatpush.msra.mxu0 %v178
    %235 = vmatpush.msra.mxu0 %v177
    %236 = vmatpush.msra.mxu0 %v176
    %237 = vmatpush.msra.mxu0 %v175
    %238 = vmatpush.msra.mxu0 %v174
    %239 = vmatpush.msra.mxu0 %v173
    %240 = vmatpush.msra.mxu0 %v172
    %241 = vmatmul.f32.gmra.mxu0 %v219
    %v242 = vpop.f32.mrf.mxu0
    %v243 = vadd.f32 %v205, %v242
    %244 = vdwg.mxu0
    %245 = vmatpush.msra.mxu0 %v203
    %246 = vmatpush.msra.mxu0 %v202
    %247 = vmatpush.msra.mxu0 %v201
    %248 = vmatpush.msra.mxu0 %v200
    %249 = vmatpush.msra.mxu0 %v199
    %250 = vmatpush.msra.mxu0 %v198
    %251 = vmatpush.msra.mxu0 %v197
    %252 = vmatpush.msra.mxu0 %v196
    %253 = vmatpush.msra.mxu0 %v195
    %254 = vmatpush.msra.mxu0 %v194
    %255 = vmatpush.msra.mxu0 %v193
    %256 = vmatpush.msra.mxu0 %v192
    %257 = vmatpush.msra.mxu0 %v191
    %258 = vmatpush.msra.mxu0 %v190
    %259 = vmatpush.msra.mxu0 %v189
    %260 = vmatpush.msra.mxu0 %v188
    %261 = vmatmul.f32.gmra.mxu0 %v222
    %v262 = vpop.f32.mrf.mxu0
    %v263 = vadd.f32 %v243, %v262
    %264 = vdwg.mxu0
    %v265 = vmax.f32 %v263, 0.0
    %v266 = vld [vmem:[%s2] sm:$0xff]
    %v267 = vld [vmem:[%s2 + $0x8] sm:$0xff]
    %v268 = vld [vmem:[%s2 + $0x10] sm:$0xff]
    %v269 = vld [vmem:[%s2 + $0x18] sm:$0xff]
    %v270 = vld [vmem:[%s2 + $0x20] sm:$0xff]
    %v271 = vld [vmem:[%s2 + $0x28] sm:$0xff]
    %v272 = vld [vmem:[%s2 + $0x30] sm:$0xff]
    %v273 = vld [vmem:[%s2 + $0x38] sm:$0xff]
    %v274 = vld [vmem:[%s2 + $0x40] sm:$0xff]
    %v275 = vld [vmem:[%s2 + $0x48] sm:$0xff]
    %v276 = vld [vmem:[%s2 + $0x50] sm:$0xff]
    %v277 = vld [vmem:[%s2 + $0x58] sm:$0xff]
    %v278 = vld [vmem:[%s2 + $0x60] sm:$0xff]
    %v279 = vld [vmem:[%s2 + $0x68] sm:$0xff]
    %v280 = vld [vmem:[%s2 + $0x70] sm:$0xff]
    %v281 = vld [vmem:[%s2 + $0x78] sm:$0xff]
    %s282 = sld [smem:[#allocation6 + $0x1]]
    %v283 = vstv %s282
    %vm284 = vcmask 523264
    %v286 = vsel %vm284, %v265, 0
    %288 = vmatpush.msra.mxu0 0.0
    %289 = vmatpush.msra.mxu0 0.0
    %290 = vmatpush.msra.mxu0 0.0
    %291 = vmatpush.msra.mxu0 0.0
    %292 = vmatpush.msra.mxu0 0.0
    %293 = vmatpush.msra.mxu0 0.0
    %294 = vmatpush.msra.mxu0 0.0
    %295 = vmatpush.msra.mxu0 0.0
    %296 = vmatpush.msra.mxu0 %v280
    %297 = vmatpush.msra.mxu0 %v278
    %298 = vmatpush.msra.mxu0 %v276
    %299 = vmatpush.msra.mxu0 %v274
    %300 = vmatpush.msra.mxu0 %v272
    %301 = vmatpush.msra.mxu0 %v270
    %302 = vmatpush.msra.mxu0 %v268
    %303 = vmatpush.msra.mxu0 %v266
    %304 = vmatmul.f32.gmra.mxu0 %v286
    %v305 = vpop.f32.mrf.mxu0
    %v306 = vadd.f32 %v283, %v305
    %307 = vdwg.mxu0
    %308 = vmatpush.msra.mxu0 0.0
    %309 = vmatpush.msra.mxu0 0.0
    %310 = vmatpush.msra.mxu0 0.0
    %311 = vmatpush.msra.mxu0 0.0
    %312 = vmatpush.msra.mxu0 0.0
    %313 = vmatpush.msra.mxu0 0.0
    %314 = vmatpush.msra.mxu0 0.0
    %315 = vmatpush.msra.mxu0 0.0
    %316 = vmatpush.msra.mxu0 %v281
    %317 = vmatpush.msra.mxu0 %v279
    %318 = vmatpush.msra.mxu0 %v277
    %319 = vmatpush.msra.mxu0 %v275
    %320 = vmatpush.msra.mxu0 %v273
    %321 = vmatpush.msra.mxu0 %v271
    %322 = vmatpush.msra.mxu0 %v269
    %323 = vmatpush.msra.mxu0 %v267
    %324 = vmatmul.f32.gmra.mxu0 %v286
    %v325 = vpop.f32.mrf.mxu0
    %v326 = vadd.f32 %v283, %v325
    %327 = vdwg.mxu0
    %v328 = vmax.f32 %v306, 0.0
    %v329 = vmax.f32 %v326, 0.0
    %v330 = vadd.f32 %v60, %v61
    %331 = vadd.xlane.f32.xlu0 %v330
    %v332 = vpop.xlane.xlu0 %331
    %v333 = vadd.f32 %v62, %v63
    %334 = vadd.xlane.f32.xlu0 %v333
    %v335 = vpop.xlane.xlu0 %334
    %v336 = vadd.f32 %v64, %v65
    %337 = vadd.xlane.f32.xlu0 %v336
    %v338 = vpop.xlane.xlu0 %337
    %v339 = vadd.f32 %v66, %v67
    %340 = vadd.xlane.f32.xlu0 %v339
    %v341 = vpop.xlane.xlu0 %340
    %v342 = vadd.f32 %v68, %v69
    %343 = vadd.xlane.f32.xlu0 %v342
    %v344 = vpop.xlane.xlu0 %343
    %v345 = vadd.f32 %v70, %v71
    %346 = vadd.xlane.f32.xlu0 %v345
    %v347 = vpop.xlane.xlu0 %346
    %v348 = vadd.f32 %v72, %v73
    %349 = vadd.xlane.f32.xlu0 %v348
    %v350 = vpop.xlane.xlu0 %349
    %v351 = vadd.f32 %v74, %v75
    %352 = vadd.xlane.f32.xlu0 %v351
    %v353 = vpop.xlane.xlu0 %352
    %v354 = vadd.f32 %v76, %v77
    %355 = vadd.xlane.f32.xlu0 %v354
    %v356 = vpop.xlane.xlu0 %355
    %v357 = vadd.f32 %v78, %v79
    %358 = vadd.xlane.f32.xlu0 %v357
    %v359 = vpop.xlane.xlu0 %358
    %v360 = vadd.f32 %v80, %v81
    %361 = vadd.xlane.f32.xlu0 %v360
    %v362 = vpop.xlane.xlu0 %361
    %v363 = vadd.f32 %v82, %v83
    %364 = vadd.xlane.f32.xlu0 %v363
    %v365 = vpop.xlane.xlu0 %364
    %v366 = vadd.f32 %v84, %v85
    %367 = vadd.xlane.f32.xlu0 %v366
    %v368 = vpop.xlane.xlu0 %367
    %v369 = vadd.f32 %v86, %v87
    %370 = vadd.xlane.f32.xlu0 %v369
    %v371 = vpop.xlane.xlu0 %370
    %v372 = vadd.f32 %v88, %v89
    %373 = vadd.xlane.f32.xlu0 %v372
    %v374 = vpop.xlane.xlu0 %373
    %v375 = vadd.f32 %v90, %v91
    %376 = vadd.xlane.f32.xlu0 %v375
    %v377 = vpop.xlane.xlu0 %376
    %v378 = vmul.f32 %v332, 0.00390625
    %v379 = vmul.f32 %v335, 0.00390625
    %v380 = vmul.f32 %v338, 0.00390625
    %v381 = vmul.f32 %v341, 0.00390625
    %v382 = vmul.f32 %v344, 0.00390625
    %v383 = vmul.f32 %v347, 0.00390625
    %v384 = vmul.f32 %v350, 0.00390625
    %v385 = vmul.f32 %v353, 0.00390625
    %v386 = vmul.f32 %v356, 0.00390625
    %v387 = vmul.f32 %v359, 0.00390625
    %v388 = vmul.f32 %v362, 0.00390625
    %v389 = vmul.f32 %v365, 0.00390625
    %v390 = vmul.f32 %v368, 0.00390625
    %v391 = vmul.f32 %v371, 0.00390625
    %v392 = vmul.f32 %v374, 0.00390625
    %v393 = vmul.f32 %v377, 0.00390625
    %v394 = vld [vmem:[%s3] sm:$0xff]
    %v395 = vld [vmem:[%s3 + $0x8] sm:$0xff]
    %v396 = vld [vmem:[%s3 + $0x10] sm:$0xff]
    %v397 = vld [vmem:[%s3 + $0x18] sm:$0xff]
    %v398 = vld [vmem:[#allocation2] sm:$0x1]
    %v400 = vperm.slane %v398, 0
    %v418 = vlaneseq
    %v419 = vand.u32 %v418, 127
    %v420 = vperm.slane %v378, %v419
    %v421 = vadd.s32 %v419, 4294967288
    %v422 = vperm.slane %v379, %v421
    %vm423 = vcmask 130112
    %v424 = vsel %vm423, %v422, %v420
    %v425 = vadd.s32 %v419, 4294967280
    %v426 = vperm.slane %v380, %v425
    %vm427 = vcmask 195712
    %v428 = vsel %vm427, %v426, %v424
    %v429 = vadd.s32 %v419, 4294967272
    %v430 = vperm.slane %v381, %v429
    %vm431 = vcmask 261312
    %v432 = vsel %vm431, %v430, %v428
    %v433 = vperm.slane %v382, %v419
    %v434 = vperm.slane %v383, %v421
    %v435 = vsel %vm423, %v434, %v433
    %v436 = vperm.slane %v384, %v425
    %v437 = vsel %vm427, %v436, %v435
    %v438 = vperm.slane %v385, %v429
    %v439 = vsel %vm431, %v438, %v437
    %v440 = vperm.slane %v386, %v419
    %v441 = vperm.slane %v387, %v421
    %v442 = vsel %vm423, %v441, %v440
    %v443 = vperm.slane %v388, %v425
    %v444 = vsel %vm427, %v443, %v442
    %v445 = vperm.slane %v389, %v429
    %v446 = vsel %vm431, %v445, %v444
    %v447 = vperm.slane %v390, %v419
    %v448 = vperm.slane %v391, %v421
    %v449 = vsel %vm423, %v448, %v447
    %v450 = vperm.slane %v392, %v425
    %v451 = vsel %vm427, %v450, %v449
    %v452 = vperm.slane %v393, %v429
    %v453 = vsel %vm431, %v452, %v451
    %v454 = vsel %vm214, %v439, %v432
    %v455 = vsel %vm216, %v446, %v454
    %v456 = vsel %vm218, %v453, %v455
    %vm457 = vcmask 261120
    %v458 = vsel %vm457, %v456, 0
    %460 = vmatpush.msra.mxu0 0.0
    %461 = vmatpush.msra.mxu0 0.0
    %462 = vmatpush.msra.mxu0 0.0
    %463 = vmatpush.msra.mxu0 0.0
    %464 = vmatpush.msra.mxu0 0.0
    %465 = vmatpush.msra.mxu0 0.0
    %466 = vmatpush.msra.mxu0 0.0
    %467 = vmatpush.msra.mxu0 0.0
    %468 = vmatpush.msra.mxu0 0.0
    %469 = vmatpush.msra.mxu0 0.0
    %470 = vmatpush.msra.mxu0 0.0
    %471 = vmatpush.msra.mxu0 0.0
    %472 = vmatpush.msra.mxu0 %v397
    %473 = vmatpush.msra.mxu0 %v396
    %474 = vmatpush.msra.mxu0 %v395
    %475 = vmatpush.msra.mxu0 %v394
    %476 = vmatmul.f32.gmra.mxu0 %v458
    %v477 = vpop.f32.mrf.mxu0
    %v478 = vadd.f32 %v400, %v477
    %479 = vdwg.mxu0
    %v480 = vmax.f32 %v478, 0.0
    %v481 = vld [vmem:[%s4] sm:$0x3]
    %v482 = vld [vmem:[%s7] sm:$0x1]
    %v483 = vperm.slane %v482, 0
    %vm484 = vcmask 15360
    %v486 = vsel %vm484, %v480, 0
    %vm488 = vcmask 1041408
    %v490 = vsel %vm488, %v481, 0
    %492 = vmatpush.msra.mxu0 0.0
    %493 = vmatpush.msra.mxu0 0.0
    %494 = vmatpush.msra.mxu0 0.0
    %495 = vmatpush.msra.mxu0 0.0
    %496 = vmatpush.msra.mxu0 0.0
    %497 = vmatpush.msra.mxu0 0.0
    %498 = vmatpush.msra.mxu0 0.0
    %499 = vmatpush.msra.mxu0 0.0
    %500 = vmatpush.msra.mxu0 0.0
    %501 = vmatpush.msra.mxu0 0.0
    %502 = vmatpush.msra.mxu0 0.0
    %503 = vmatpush.msra.mxu0 0.0
    %504 = vmatpush.msra.mxu0 0.0
    %505 = vmatpush.msra.mxu0 0.0
    %506 = vmatpush.msra.mxu0 0.0
    %507 = vmatpush.msra.mxu0 %v490
    %508 = vmatmul.f32.gmra.mxu0 %v486
    %v509 = vpop.f32.mrf.mxu0
    %v510 = vadd.f32 %v483, %v509
    %511 = vdwg.mxu0
    %v512 = vmax.f32 %v510, 0.0
    %v513 = vld [vmem:[%s5] sm:$0xff]
    %v514 = vld [vmem:[%s5 + $0x8] sm:$0xff]
    %v515 = vld [vmem:[%s5 + $0x10] sm:$0xff]
    %v516 = vld [vmem:[%s5 + $0x18] sm:$0xff]
    %v518 = vsel %vm457, %v512, 0
    %520 = vmatpush.msra.mxu0 0.0
    %521 = vmatpush.msra.mxu0 0.0
    %522 = vmatpush.msra.mxu0 0.0
    %523 = vmatpush.msra.mxu0 0.0
    %524 = vmatpush.msra.mxu0 0.0
    %525 = vmatpush.msra.mxu0 0.0
    %526 = vmatpush.msra.mxu0 0.0
    %527 = vmatpush.msra.mxu0 0.0
    %528 = vmatpush.msra.mxu0 0.0
    %529 = vmatpush.msra.mxu0 0.0
    %530 = vmatpush.msra.mxu0 0.0
    %531 = vmatpush.msra.mxu0 0.0
    %532 = vmatpush.msra.mxu0 %v516
    %533 = vmatpush.msra.mxu0 %v515
    %534 = vmatpush.msra.mxu0 %v514
    %535 = vmatpush.msra.mxu0 %v513
    %536 = vmatmul.f32.gmra.mxu0 %v518
    %v537 = vpop.f32.mrf.mxu0
    %v538 = vadd.f32 0.0, %v537
    %539 = vdwg.mxu0
    %v540 = vld [vmem:[%s7 + $0x1] sm:$0x1]
    %v541 = vperm.slane %v538, 0
    %v542 = vlaneseq
    %v543 = vshrl.u32 %v542, 7
    %545 = vset.pattern.permute.xlu0 %v543
    %546 = vperm.xlu0 %545, %v541
    %v547 = vpop.permute.xlu0 %546
    %v548 = vlaneseq
    %v549 = vshrl.u32 %v548, 7
    %v550 = vadd.s32 %v549, 8
    %551 = vset.pattern.permute.xlu0 %v550
    %552 = vperm.xlu0 %551, %v541
    %v553 = vpop.permute.xlu0 %552
    %v554 = vlaneseq
    %v555 = vshrl.u32 %v554, 7
    %v556 = vadd.s32 %v555, 16
    %557 = vset.pattern.permute.xlu0 %v556
    %558 = vperm.xlu0 %557, %v541
    %v559 = vpop.permute.xlu0 %558
    %v560 = vlaneseq
    %v561 = vshrl.u32 %v560, 7
    %v562 = vadd.s32 %v561, 24
    %563 = vset.pattern.permute.xlu0 %v562
    %564 = vperm.xlu0 %563, %v541
    %v565 = vpop.permute.xlu0 %564
    %v566 = vperm.slane %v538, 1
    %v567 = vlaneseq
    %v568 = vshrl.u32 %v567, 7
    %570 = vset.pattern.permute.xlu0 %v568
    %571 = vperm.xlu0 %570, %v566
    %v572 = vpop.permute.xlu0 %571
    %v573 = vlaneseq
    %v574 = vshrl.u32 %v573, 7
    %v575 = vadd.s32 %v574, 8
    %576 = vset.pattern.permute.xlu0 %v575
    %577 = vperm.xlu0 %576, %v566
    %v578 = vpop.permute.xlu0 %577
    %v579 = vlaneseq
    %v580 = vshrl.u32 %v579, 7
    %v581 = vadd.s32 %v580, 16
    %582 = vset.pattern.permute.xlu0 %v581
    %583 = vperm.xlu0 %582, %v566
    %v584 = vpop.permute.xlu0 %583
    %v585 = vlaneseq
    %v586 = vshrl.u32 %v585, 7
    %v587 = vadd.s32 %v586, 24
    %588 = vset.pattern.permute.xlu0 %v587
    %589 = vperm.xlu0 %588, %v566
    %v590 = vpop.permute.xlu0 %589
    %v591 = vperm.slane %v538, 2
    %v592 = vlaneseq
    %v593 = vshrl.u32 %v592, 7
    %595 = vset.pattern.permute.xlu0 %v593
    %596 = vperm.xlu0 %595, %v591
    %v597 = vpop.permute.xlu0 %596
    %v598 = vlaneseq
    %v599 = vshrl.u32 %v598, 7
    %v600 = vadd.s32 %v599, 8
    %601 = vset.pattern.permute.xlu0 %v600
    %602 = vperm.xlu0 %601, %v591
    %v603 = vpop.permute.xlu0 %602
    %v604 = vlaneseq
    %v605 = vshrl.u32 %v604, 7
    %v606 = vadd.s32 %v605, 16
    %607 = vset.pattern.permute.xlu0 %v606
    %608 = vperm.xlu0 %607, %v591
    %v609 = vpop.permute.xlu0 %608
    %v610 = vlaneseq
    %v611 = vshrl.u32 %v610, 7
    %v612 = vadd.s32 %v611, 24
    %613 = vset.pattern.permute.xlu0 %v612
    %614 = vperm.xlu0 %613, %v591
    %v615 = vpop.permute.xlu0 %614
    %v616 = vperm.slane %v538, 3
    %v617 = vlaneseq
    %v618 = vshrl.u32 %v617, 7
    %620 = vset.pattern.permute.xlu0 %v618
    %621 = vperm.xlu0 %620, %v616
    %v622 = vpop.permute.xlu0 %621
    %v623 = vlaneseq
    %v624 = vshrl.u32 %v623, 7
    %v625 = vadd.s32 %v624, 8
    %626 = vset.pattern.permute.xlu0 %v625
    %627 = vperm.xlu0 %626, %v616
    %v628 = vpop.permute.xlu0 %627
    %v629 = vlaneseq
    %v630 = vshrl.u32 %v629, 7
    %v631 = vadd.s32 %v630, 16
    %632 = vset.pattern.permute.xlu0 %v631
    %633 = vperm.xlu0 %632, %v616
    %v634 = vpop.permute.xlu0 %633
    %v635 = vlaneseq
    %v636 = vshrl.u32 %v635, 7
    %v637 = vadd.s32 %v636, 24
    %638 = vset.pattern.permute.xlu0 %v637
    %639 = vperm.xlu0 %638, %v616
    %v640 = vpop.permute.xlu0 %639
    %v643 = vrot.slane %v329, 7
    %vm644 = vcmask 1040384
    %v645 = vsel %vm644, %v328, %v643
    %v646 = vsel %vm214, %v328, %v643
    %v647 = vrot.slane %v646, 1
    %v648 = vsel %vm216, %v328, %v643
    %v649 = vrot.slane %v648, 2
    %v650 = vsel %vm218, %v328, %v643
    %v651 = vrot.slane %v650, 3
    %v652 = vperm.slane %v645, 0
    %v653 = vperm.slane %v645, 1
    %v654 = vperm.slane %v647, 0
    %v655 = vperm.slane %v647, 1
    %v656 = vperm.slane %v649, 0
    %v657 = vperm.slane %v649, 1
    %v658 = vperm.slane %v651, 0
    %v659 = vperm.slane %v651, 1
    %v668 = vmul.f32 %v547, %v652
    %v669 = vmul.f32 %v547, %v653
    %v670 = vmul.f32 %v553, %v652
    %v671 = vmul.f32 %v553, %v653
    %v672 = vmul.f32 %v559, %v652
    %v673 = vmul.f32 %v559, %v653
    %v674 = vmul.f32 %v565, %v652
    %v675 = vmul.f32 %v565, %v653
    %v676 = vmul.f32 %v572, %v654
    %v677 = vmul.f32 %v572, %v655
    %v678 = vmul.f32 %v578, %v654
    %v679 = vmul.f32 %v578, %v655
    %v680 = vmul.f32 %v584, %v654
    %v681 = vmul.f32 %v584, %v655
    %v682 = vmul.f32 %v590, %v654
    %v683 = vmul.f32 %v590, %v655
    %v684 = vmul.f32 %v597, %v656
    %v685 = vmul.f32 %v597, %v657
    %v686 = vmul.f32 %v603, %v656
    %v687 = vmul.f32 %v603, %v657
    %v688 = vmul.f32 %v609, %v656
    %v689 = vmul.f32 %v609, %v657
    %v690 = vmul.f32 %v615, %v656
    %v691 = vmul.f32 %v615, %v657
    %v692 = vmul.f32 %v622, %v658
    %v693 = vmul.f32 %v622, %v659
    %v694 = vmul.f32 %v628, %v658
    %v695 = vmul.f32 %v628, %v659
    %v696 = vmul.f32 %v634, %v658
    %v697 = vmul.f32 %v634, %v659
    %v698 = vmul.f32 %v640, %v658
    %v699 = vmul.f32 %v640, %v659
    %v700 = vperm.slane %v540, 0
    %v701 = vlaneseq
    %v702 = vshrl.u32 %v701, 7
    %704 = vset.pattern.permute.xlu0 %v702
    %705 = vperm.xlu0 %704, %v700
    %v706 = vpop.permute.xlu0 %705
    %v707 = vlaneseq
    %v708 = vshrl.u32 %v707, 7
    %v709 = vadd.s32 %v708, 8
    %710 = vset.pattern.permute.xlu0 %v709
    %711 = vperm.xlu0 %710, %v700
    %v712 = vpop.permute.xlu0 %711
    %v713 = vlaneseq
    %v714 = vshrl.u32 %v713, 7
    %v715 = vadd.s32 %v714, 16
    %716 = vset.pattern.permute.xlu0 %v715
    %717 = vperm.xlu0 %716, %v700
    %v718 = vpop.permute.xlu0 %717
    %v719 = vlaneseq
    %v720 = vshrl.u32 %v719, 7
    %v721 = vadd.s32 %v720, 24
    %722 = vset.pattern.permute.xlu0 %v721
    %723 = vperm.xlu0 %722, %v700
    %v724 = vpop.permute.xlu0 %723
    %v725 = vadd.f32 %v668, %v706
    %v726 = vadd.f32 %v669, %v706
    %v727 = vadd.f32 %v670, %v712
    %v728 = vadd.f32 %v671, %v712
    %v729 = vadd.f32 %v672, %v718
    %v730 = vadd.f32 %v673, %v718
    %v731 = vadd.f32 %v674, %v724
    %v732 = vadd.f32 %v675, %v724
    %v733 = vadd.f32 %v676, %v706
    %v734 = vadd.f32 %v677, %v706
    %v735 = vadd.f32 %v678, %v712
    %v736 = vadd.f32 %v679, %v712
    %v737 = vadd.f32 %v680, %v718
    %v738 = vadd.f32 %v681, %v718
    %v739 = vadd.f32 %v682, %v724
    %v740 = vadd.f32 %v683, %v724
    %v741 = vadd.f32 %v684, %v706
    %v742 = vadd.f32 %v685, %v706
    %v743 = vadd.f32 %v686, %v712
    %v744 = vadd.f32 %v687, %v712
    %v745 = vadd.f32 %v688, %v718
    %v746 = vadd.f32 %v689, %v718
    %v747 = vadd.f32 %v690, %v724
    %v748 = vadd.f32 %v691, %v724
    %v749 = vadd.f32 %v692, %v706
    %v750 = vadd.f32 %v693, %v706
    %v751 = vadd.f32 %v694, %v712
    %v752 = vadd.f32 %v695, %v712
    %v753 = vadd.f32 %v696, %v718
    %v754 = vadd.f32 %v697, %v718
    %v755 = vadd.f32 %v698, %v724
    %v756 = vadd.f32 %v699, %v724
    %v757 = vmax.f32 %v725, 0.0
    %v758 = vmax.f32 %v726, 0.0
    %v759 = vmax.f32 %v727, 0.0
    %v760 = vmax.f32 %v728, 0.0
    %v761 = vmax.f32 %v729, 0.0
    %v762 = vmax.f32 %v730, 0.0
    %v763 = vmax.f32 %v731, 0.0
    %v764 = vmax.f32 %v732, 0.0
    %v765 = vmax.f32 %v733, 0.0
    %v766 = vmax.f32 %v734, 0.0
    %v767 = vmax.f32 %v735, 0.0
    %v768 = vmax.f32 %v736, 0.0
    %v769 = vmax.f32 %v737, 0.0
    %v770 = vmax.f32 %v738, 0.0
    %v771 = vmax.f32 %v739, 0.0
    %v772 = vmax.f32 %v740, 0.0
    %v773 = vmax.f32 %v741, 0.0
    %v774 = vmax.f32 %v742, 0.0
    %v775 = vmax.f32 %v743, 0.0
    %v776 = vmax.f32 %v744, 0.0
    %v777 = vmax.f32 %v745, 0.0
    %v778 = vmax.f32 %v746, 0.0
    %v779 = vmax.f32 %v747, 0.0
    %v780 = vmax.f32 %v748, 0.0
    %v781 = vmax.f32 %v749, 0.0
    %v782 = vmax.f32 %v750, 0.0
    %v783 = vmax.f32 %v751, 0.0
    %v784 = vmax.f32 %v752, 0.0
    %v785 = vmax.f32 %v753, 0.0
    %v786 = vmax.f32 %v754, 0.0
    %v787 = vmax.f32 %v755, 0.0
    %v788 = vmax.f32 %v756, 0.0
    %v789 = vxor.u32 %v757, 2147483648
    %v790 = vxor.u32 %v758, 2147483648
    %v791 = vxor.u32 %v759, 2147483648
    %v792 = vxor.u32 %v760, 2147483648
    %v793 = vxor.u32 %v761, 2147483648
    %v794 = vxor.u32 %v762, 2147483648
    %v795 = vxor.u32 %v763, 2147483648
    %v796 = vxor.u32 %v764, 2147483648
    %v797 = vxor.u32 %v765, 2147483648
    %v798 = vxor.u32 %v766, 2147483648
    %v799 = vxor.u32 %v767, 2147483648
    %v800 = vxor.u32 %v768, 2147483648
    %v801 = vxor.u32 %v769, 2147483648
    %v802 = vxor.u32 %v770, 2147483648
    %v803 = vxor.u32 %v771, 2147483648
    %v804 = vxor.u32 %v772, 2147483648
    %v805 = vxor.u32 %v773, 2147483648
    %v806 = vxor.u32 %v774, 2147483648
    %v807 = vxor.u32 %v775, 2147483648
    %v808 = vxor.u32 %v776, 2147483648
    %v809 = vxor.u32 %v777, 2147483648
    %v810 = vxor.u32 %v778, 2147483648
    %v811 = vxor.u32 %v779, 2147483648
    %v812 = vxor.u32 %v780, 2147483648
    %v813 = vxor.u32 %v781, 2147483648
    %v814 = vxor.u32 %v782, 2147483648
    %v815 = vxor.u32 %v783, 2147483648
    %v816 = vxor.u32 %v784, 2147483648
    %v817 = vxor.u32 %v785, 2147483648
    %v818 = vxor.u32 %v786, 2147483648
    %v819 = vxor.u32 %v787, 2147483648
    %v820 = vxor.u32 %v788, 2147483648
    %v821 = vmul.f32 %v789, 1.442695
    %v822 = vpow.pop %v821
    %v823 = vmul.f32 %v790, 1.442695
    %v824 = vpow.pop %v823
    %v825 = vmul.f32 %v791, 1.442695
    %v826 = vpow.pop %v825
    %v827 = vmul.f32 %v792, 1.442695
    %v828 = vpow.pop %v827
    %v829 = vmul.f32 %v793, 1.442695
    %v830 = vpow.pop %v829
    %v831 = vmul.f32 %v794, 1.442695
    %v832 = vpow.pop %v831
    %v833 = vmul.f32 %v795, 1.442695
    %v834 = vpow.pop %v833
    %v835 = vmul.f32 %v796, 1.442695
    %v836 = vpow.pop %v835
    %v837 = vmul.f32 %v797, 1.442695
    %v838 = vpow.pop %v837
    %v839 = vmul.f32 %v798, 1.442695
    %v840 = vpow.pop %v839
    %v841 = vmul.f32 %v799, 1.442695
    %v842 = vpow.pop %v841
    %v843 = vmul.f32 %v800, 1.442695
    %v844 = vpow.pop %v843
    %v845 = vmul.f32 %v801, 1.442695
    %v846 = vpow.pop %v845
    %v847 = vmul.f32 %v802, 1.442695
    %v848 = vpow.pop %v847
    %v849 = vmul.f32 %v803, 1.442695
    %v850 = vpow.pop %v849
    %v851 = vmul.f32 %v804, 1.442695
    %v852 = vpow.pop %v851
    %v853 = vmul.f32 %v805, 1.442695
    %v854 = vpow.pop %v853
    %v855 = vmul.f32 %v806, 1.442695
    %v856 = vpow.pop %v855
    %v857 = vmul.f32 %v807, 1.442695
    %v858 = vpow.pop %v857
    %v859 = vmul.f32 %v808, 1.442695
    %v860 = vpow.pop %v859
    %v861 = vmul.f32 %v809, 1.442695
    %v862 = vpow.pop %v861
    %v863 = vmul.f32 %v810, 1.442695
    %v864 = vpow.pop %v863
    %v865 = vmul.f32 %v811, 1.442695
    %v866 = vpow.pop %v865
    %v867 = vmul.f32 %v812, 1.442695
    %v868 = vpow.pop %v867
    %v869 = vmul.f32 %v813, 1.442695
    %v870 = vpow.pop %v869
    %v871 = vmul.f32 %v814, 1.442695
    %v872 = vpow.pop %v871
    %v873 = vmul.f32 %v815, 1.442695
    %v874 = vpow.pop %v873
    %v875 = vmul.f32 %v816, 1.442695
    %v876 = vpow.pop %v875
    %v877 = vmul.f32 %v817, 1.442695
    %v878 = vpow.pop %v877
    %v879 = vmul.f32 %v818, 1.442695
    %v880 = vpow.pop %v879
    %v881 = vmul.f32 %v819, 1.442695
    %v882 = vpow.pop %v881
    %v883 = vmul.f32 %v820, 1.442695
    %v884 = vpow.pop %v883
    %v885 = vadd.f32 %v822, 1.0
    %v886 = vadd.f32 %v824, 1.0
    %v887 = vadd.f32 %v826, 1.0
    %v888 = vadd.f32 %v828, 1.0
    %v889 = vadd.f32 %v830, 1.0
    %v890 = vadd.f32 %v832, 1.0
    %v891 = vadd.f32 %v834, 1.0
    %v892 = vadd.f32 %v836, 1.0
    %v893 = vadd.f32 %v838, 1.0
    %v894 = vadd.f32 %v840, 1.0
    %v895 = vadd.f32 %v842, 1.0
    %v896 = vadd.f32 %v844, 1.0
    %v897 = vadd.f32 %v846, 1.0
    %v898 = vadd.f32 %v848, 1.0
    %v899 = vadd.f32 %v850, 1.0
    %v900 = vadd.f32 %v852, 1.0
    %v901 = vadd.f32 %v854, 1.0
    %v902 = vadd.f32 %v856, 1.0
    %v903 = vadd.f32 %v858, 1.0
    %v904 = vadd.f32 %v860, 1.0
    %v905 = vadd.f32 %v862, 1.0
    %v906 = vadd.f32 %v864, 1.0
    %v907 = vadd.f32 %v866, 1.0
    %v908 = vadd.f32 %v868, 1.0
    %v909 = vadd.f32 %v870, 1.0
    %v910 = vadd.f32 %v872, 1.0
    %v911 = vadd.f32 %v874, 1.0
    %v912 = vadd.f32 %v876, 1.0
    %v913 = vadd.f32 %v878, 1.0
    %v914 = vadd.f32 %v880, 1.0
    %v915 = vadd.f32 %v882, 1.0
    %v916 = vadd.f32 %v884, 1.0
    %v917 = vrcp.pop %v885
    %v918 = vmul.f32 %v885, %v917
    %v919 = vsub.f32 1.0, %v918
    %v920 = vmul.f32 %v917, %v919
    %v921 = vadd.f32 %v917, %v920
    %vm922 = vweird.f32 %v885
    %vm923 = vweird.f32 %v917
    %vm924 = vmor %vm922, %vm923
    %v925 = vsel %vm924, %v917, %v921
    %v926 = vand.u32 2147483647, %v885
    %vm927 = vcmp.eq.f32.partialorder %v926, 8.507059e+37
    %v928 = vand.u32 %v885, 2147483648
    %v929 = vor.u32 1.1754944e-38, %v928
    %v930 = vsel %vm927, %v929, %v925
    %v931 = vmul.f32 1.0, %v930
    %v932 = vrcp.pop %v886
    %v933 = vmul.f32 %v886, %v932
    %v934 = vsub.f32 1.0, %v933
    %v935 = vmul.f32 %v932, %v934
    %v936 = vadd.f32 %v932, %v935
    %vm937 = vweird.f32 %v886
    %vm938 = vweird.f32 %v932
    %vm939 = vmor %vm937, %vm938
    %v940 = vsel %vm939, %v932, %v936
    %v941 = vand.u32 2147483647, %v886
    %vm942 = vcmp.eq.f32.partialorder %v941, 8.507059e+37
    %v943 = vand.u32 %v886, 2147483648
    %v944 = vor.u32 1.1754944e-38, %v943
    %v945 = vsel %vm942, %v944, %v940
    %v946 = vmul.f32 1.0, %v945
    %v947 = vrcp.pop %v887
    %v948 = vmul.f32 %v887, %v947
    %v949 = vsub.f32 1.0, %v948
    %v950 = vmul.f32 %v947, %v949
    %v951 = vadd.f32 %v947, %v950
    %vm952 = vweird.f32 %v887
    %vm953 = vweird.f32 %v947
    %vm954 = vmor %vm952, %vm953
    %v955 = vsel %vm954, %v947, %v951
    %v956 = vand.u32 2147483647, %v887
    %vm957 = vcmp.eq.f32.partialorder %v956, 8.507059e+37
    %v958 = vand.u32 %v887, 2147483648
    %v959 = vor.u32 1.1754944e-38, %v958
    %v960 = vsel %vm957, %v959, %v955
    %v961 = vmul.f32 1.0, %v960
    %v962 = vrcp.pop %v888
    %v963 = vmul.f32 %v888, %v962
    %v964 = vsub.f32 1.0, %v963
    %v965 = vmul.f32 %v962, %v964
    %v966 = vadd.f32 %v962, %v965
    %vm967 = vweird.f32 %v888
    %vm968 = vweird.f32 %v962
    %vm969 = vmor %vm967, %vm968
    %v970 = vsel %vm969, %v962, %v966
    %v971 = vand.u32 2147483647, %v888
    %vm972 = vcmp.eq.f32.partialorder %v971, 8.507059e+37
    %v973 = vand.u32 %v888, 2147483648
    %v974 = vor.u32 1.1754944e-38, %v973
    %v975 = vsel %vm972, %v974, %v970
    %v976 = vmul.f32 1.0, %v975
    %v977 = vrcp.pop %v889
    %v978 = vmul.f32 %v889, %v977
    %v979 = vsub.f32 1.0, %v978
    %v980 = vmul.f32 %v977, %v979
    %v981 = vadd.f32 %v977, %v980
    %vm982 = vweird.f32 %v889
    %vm983 = vweird.f32 %v977
    %vm984 = vmor %vm982, %vm983
    %v985 = vsel %vm984, %v977, %v981
    %v986 = vand.u32 2147483647, %v889
    %vm987 = vcmp.eq.f32.partialorder %v986, 8.507059e+37
    %v988 = vand.u32 %v889, 2147483648
    %v989 = vor.u32 1.1754944e-38, %v988
    %v990 = vsel %vm987, %v989, %v985
    %v991 = vmul.f32 1.0, %v990
    %v992 = vrcp.pop %v890
    %v993 = vmul.f32 %v890, %v992
    %v994 = vsub.f32 1.0, %v993
    %v995 = vmul.f32 %v992, %v994
    %v996 = vadd.f32 %v992, %v995
    %vm997 = vweird.f32 %v890
    %vm998 = vweird.f32 %v992
    %vm999 = vmor %vm997, %vm998
    %v1000 = vsel %vm999, %v992, %v996
    %v1001 = vand.u32 2147483647, %v890
    %vm1002 = vcmp.eq.f32.partialorder %v1001, 8.507059e+37
    %v1003 = vand.u32 %v890, 2147483648
    %v1004 = vor.u32 1.1754944e-38, %v1003
    %v1005 = vsel %vm1002, %v1004, %v1000
    %v1006 = vmul.f32 1.0, %v1005
    %v1007 = vrcp.pop %v891
    %v1008 = vmul.f32 %v891, %v1007
    %v1009 = vsub.f32 1.0, %v1008
    %v1010 = vmul.f32 %v1007, %v1009
    %v1011 = vadd.f32 %v1007, %v1010
    %vm1012 = vweird.f32 %v891
    %vm1013 = vweird.f32 %v1007
    %vm1014 = vmor %vm1012, %vm1013
    %v1015 = vsel %vm1014, %v1007, %v1011
    %v1016 = vand.u32 2147483647, %v891
    %vm1017 = vcmp.eq.f32.partialorder %v1016, 8.507059e+37
    %v1018 = vand.u32 %v891, 2147483648
    %v1019 = vor.u32 1.1754944e-38, %v1018
    %v1020 = vsel %vm1017, %v1019, %v1015
    %v1021 = vmul.f32 1.0, %v1020
    %v1022 = vrcp.pop %v892
    %v1023 = vmul.f32 %v892, %v1022
    %v1024 = vsub.f32 1.0, %v1023
    %v1025 = vmul.f32 %v1022, %v1024
    %v1026 = vadd.f32 %v1022, %v1025
    %vm1027 = vweird.f32 %v892
    %vm1028 = vweird.f32 %v1022
    %vm1029 = vmor %vm1027, %vm1028
    %v1030 = vsel %vm1029, %v1022, %v1026
    %v1031 = vand.u32 2147483647, %v892
    %vm1032 = vcmp.eq.f32.partialorder %v1031, 8.507059e+37
    %v1033 = vand.u32 %v892, 2147483648
    %v1034 = vor.u32 1.1754944e-38, %v1033
    %v1035 = vsel %vm1032, %v1034, %v1030
    %v1036 = vmul.f32 1.0, %v1035
    %v1037 = vrcp.pop %v893
    %v1038 = vmul.f32 %v893, %v1037
    %v1039 = vsub.f32 1.0, %v1038
    %v1040 = vmul.f32 %v1037, %v1039
    %v1041 = vadd.f32 %v1037, %v1040
    %vm1042 = vweird.f32 %v893
    %vm1043 = vweird.f32 %v1037
    %vm1044 = vmor %vm1042, %vm1043
    %v1045 = vsel %vm1044, %v1037, %v1041
    %v1046 = vand.u32 2147483647, %v893
    %vm1047 = vcmp.eq.f32.partialorder %v1046, 8.507059e+37
    %v1048 = vand.u32 %v893, 2147483648
    %v1049 = vor.u32 1.1754944e-38, %v1048
    %v1050 = vsel %vm1047, %v1049, %v1045
    %v1051 = vmul.f32 1.0, %v1050
    %v1052 = vrcp.pop %v894
    %v1053 = vmul.f32 %v894, %v1052
    %v1054 = vsub.f32 1.0, %v1053
    %v1055 = vmul.f32 %v1052, %v1054
    %v1056 = vadd.f32 %v1052, %v1055
    %vm1057 = vweird.f32 %v894
    %vm1058 = vweird.f32 %v1052
    %vm1059 = vmor %vm1057, %vm1058
    %v1060 = vsel %vm1059, %v1052, %v1056
    %v1061 = vand.u32 2147483647, %v894
    %vm1062 = vcmp.eq.f32.partialorder %v1061, 8.507059e+37
    %v1063 = vand.u32 %v894, 2147483648
    %v1064 = vor.u32 1.1754944e-38, %v1063
    %v1065 = vsel %vm1062, %v1064, %v1060
    %v1066 = vmul.f32 1.0, %v1065
    %v1067 = vrcp.pop %v895
    %v1068 = vmul.f32 %v895, %v1067
    %v1069 = vsub.f32 1.0, %v1068
    %v1070 = vmul.f32 %v1067, %v1069
    %v1071 = vadd.f32 %v1067, %v1070
    %vm1072 = vweird.f32 %v895
    %vm1073 = vweird.f32 %v1067
    %vm1074 = vmor %vm1072, %vm1073
    %v1075 = vsel %vm1074, %v1067, %v1071
    %v1076 = vand.u32 2147483647, %v895
    %vm1077 = vcmp.eq.f32.partialorder %v1076, 8.507059e+37
    %v1078 = vand.u32 %v895, 2147483648
    %v1079 = vor.u32 1.1754944e-38, %v1078
    %v1080 = vsel %vm1077, %v1079, %v1075
    %v1081 = vmul.f32 1.0, %v1080
    %v1082 = vrcp.pop %v896
    %v1083 = vmul.f32 %v896, %v1082
    %v1084 = vsub.f32 1.0, %v1083
    %v1085 = vmul.f32 %v1082, %v1084
    %v1086 = vadd.f32 %v1082, %v1085
    %vm1087 = vweird.f32 %v896
    %vm1088 = vweird.f32 %v1082
    %vm1089 = vmor %vm1087, %vm1088
    %v1090 = vsel %vm1089, %v1082, %v1086
    %v1091 = vand.u32 2147483647, %v896
    %vm1092 = vcmp.eq.f32.partialorder %v1091, 8.507059e+37
    %v1093 = vand.u32 %v896, 2147483648
    %v1094 = vor.u32 1.1754944e-38, %v1093
    %v1095 = vsel %vm1092, %v1094, %v1090
    %v1096 = vmul.f32 1.0, %v1095
    %v1097 = vrcp.pop %v897
    %v1098 = vmul.f32 %v897, %v1097
    %v1099 = vsub.f32 1.0, %v1098
    %v1100 = vmul.f32 %v1097, %v1099
    %v1101 = vadd.f32 %v1097, %v1100
    %vm1102 = vweird.f32 %v897
    %vm1103 = vweird.f32 %v1097
    %vm1104 = vmor %vm1102, %vm1103
    %v1105 = vsel %vm1104, %v1097, %v1101
    %v1106 = vand.u32 2147483647, %v897
    %vm1107 = vcmp.eq.f32.partialorder %v1106, 8.507059e+37
    %v1108 = vand.u32 %v897, 2147483648
    %v1109 = vor.u32 1.1754944e-38, %v1108
    %v1110 = vsel %vm1107, %v1109, %v1105
    %v1111 = vmul.f32 1.0, %v1110
    %v1112 = vrcp.pop %v898
    %v1113 = vmul.f32 %v898, %v1112
    %v1114 = vsub.f32 1.0, %v1113
    %v1115 = vmul.f32 %v1112, %v1114
    %v1116 = vadd.f32 %v1112, %v1115
    %vm1117 = vweird.f32 %v898
    %vm1118 = vweird.f32 %v1112
    %vm1119 = vmor %vm1117, %vm1118
    %v1120 = vsel %vm1119, %v1112, %v1116
    %v1121 = vand.u32 2147483647, %v898
    %vm1122 = vcmp.eq.f32.partialorder %v1121, 8.507059e+37
    %v1123 = vand.u32 %v898, 2147483648
    %v1124 = vor.u32 1.1754944e-38, %v1123
    %v1125 = vsel %vm1122, %v1124, %v1120
    %v1126 = vmul.f32 1.0, %v1125
    %v1127 = vrcp.pop %v899
    %v1128 = vmul.f32 %v899, %v1127
    %v1129 = vsub.f32 1.0, %v1128
    %v1130 = vmul.f32 %v1127, %v1129
    %v1131 = vadd.f32 %v1127, %v1130
    %vm1132 = vweird.f32 %v899
    %vm1133 = vweird.f32 %v1127
    %vm1134 = vmor %vm1132, %vm1133
    %v1135 = vsel %vm1134, %v1127, %v1131
    %v1136 = vand.u32 2147483647, %v899
    %vm1137 = vcmp.eq.f32.partialorder %v1136, 8.507059e+37
    %v1138 = vand.u32 %v899, 2147483648
    %v1139 = vor.u32 1.1754944e-38, %v1138
    %v1140 = vsel %vm1137, %v1139, %v1135
    %v1141 = vmul.f32 1.0, %v1140
    %v1142 = vrcp.pop %v900
    %v1143 = vmul.f32 %v900, %v1142
    %v1144 = vsub.f32 1.0, %v1143
    %v1145 = vmul.f32 %v1142, %v1144
    %v1146 = vadd.f32 %v1142, %v1145
    %vm1147 = vweird.f32 %v900
    %vm1148 = vweird.f32 %v1142
    %vm1149 = vmor %vm1147, %vm1148
    %v1150 = vsel %vm1149, %v1142, %v1146
    %v1151 = vand.u32 2147483647, %v900
    %vm1152 = vcmp.eq.f32.partialorder %v1151, 8.507059e+37
    %v1153 = vand.u32 %v900, 2147483648
    %v1154 = vor.u32 1.1754944e-38, %v1153
    %v1155 = vsel %vm1152, %v1154, %v1150
    %v1156 = vmul.f32 1.0, %v1155
    %v1157 = vrcp.pop %v901
    %v1158 = vmul.f32 %v901, %v1157
    %v1159 = vsub.f32 1.0, %v1158
    %v1160 = vmul.f32 %v1157, %v1159
    %v1161 = vadd.f32 %v1157, %v1160
    %vm1162 = vweird.f32 %v901
    %vm1163 = vweird.f32 %v1157
    %vm1164 = vmor %vm1162, %vm1163
    %v1165 = vsel %vm1164, %v1157, %v1161
    %v1166 = vand.u32 2147483647, %v901
    %vm1167 = vcmp.eq.f32.partialorder %v1166, 8.507059e+37
    %v1168 = vand.u32 %v901, 2147483648
    %v1169 = vor.u32 1.1754944e-38, %v1168
    %v1170 = vsel %vm1167, %v1169, %v1165
    %v1171 = vmul.f32 1.0, %v1170
    %v1172 = vrcp.pop %v902
    %v1173 = vmul.f32 %v902, %v1172
    %v1174 = vsub.f32 1.0, %v1173
    %v1175 = vmul.f32 %v1172, %v1174
    %v1176 = vadd.f32 %v1172, %v1175
    %vm1177 = vweird.f32 %v902
    %vm1178 = vweird.f32 %v1172
    %vm1179 = vmor %vm1177, %vm1178
    %v1180 = vsel %vm1179, %v1172, %v1176
    %v1181 = vand.u32 2147483647, %v902
    %vm1182 = vcmp.eq.f32.partialorder %v1181, 8.507059e+37
    %v1183 = vand.u32 %v902, 2147483648
    %v1184 = vor.u32 1.1754944e-38, %v1183
    %v1185 = vsel %vm1182, %v1184, %v1180
    %v1186 = vmul.f32 1.0, %v1185
    %v1187 = vrcp.pop %v903
    %v1188 = vmul.f32 %v903, %v1187
    %v1189 = vsub.f32 1.0, %v1188
    %v1190 = vmul.f32 %v1187, %v1189
    %v1191 = vadd.f32 %v1187, %v1190
    %vm1192 = vweird.f32 %v903
    %vm1193 = vweird.f32 %v1187
    %vm1194 = vmor %vm1192, %vm1193
    %v1195 = vsel %vm1194, %v1187, %v1191
    %v1196 = vand.u32 2147483647, %v903
    %vm1197 = vcmp.eq.f32.partialorder %v1196, 8.507059e+37
    %v1198 = vand.u32 %v903, 2147483648
    %v1199 = vor.u32 1.1754944e-38, %v1198
    %v1200 = vsel %vm1197, %v1199, %v1195
    %v1201 = vmul.f32 1.0, %v1200
    %v1202 = vrcp.pop %v904
    %v1203 = vmul.f32 %v904, %v1202
    %v1204 = vsub.f32 1.0, %v1203
    %v1205 = vmul.f32 %v1202, %v1204
    %v1206 = vadd.f32 %v1202, %v1205
    %vm1207 = vweird.f32 %v904
    %vm1208 = vweird.f32 %v1202
    %vm1209 = vmor %vm1207, %vm1208
    %v1210 = vsel %vm1209, %v1202, %v1206
    %v1211 = vand.u32 2147483647, %v904
    %vm1212 = vcmp.eq.f32.partialorder %v1211, 8.507059e+37
    %v1213 = vand.u32 %v904, 2147483648
    %v1214 = vor.u32 1.1754944e-38, %v1213
    %v1215 = vsel %vm1212, %v1214, %v1210
    %v1216 = vmul.f32 1.0, %v1215
    %v1217 = vrcp.pop %v905
    %v1218 = vmul.f32 %v905, %v1217
    %v1219 = vsub.f32 1.0, %v1218
    %v1220 = vmul.f32 %v1217, %v1219
    %v1221 = vadd.f32 %v1217, %v1220
    %vm1222 = vweird.f32 %v905
    %vm1223 = vweird.f32 %v1217
    %vm1224 = vmor %vm1222, %vm1223
    %v1225 = vsel %vm1224, %v1217, %v1221
    %v1226 = vand.u32 2147483647, %v905
    %vm1227 = vcmp.eq.f32.partialorder %v1226, 8.507059e+37
    %v1228 = vand.u32 %v905, 2147483648
    %v1229 = vor.u32 1.1754944e-38, %v1228
    %v1230 = vsel %vm1227, %v1229, %v1225
    %v1231 = vmul.f32 1.0, %v1230
    %v1232 = vrcp.pop %v906
    %v1233 = vmul.f32 %v906, %v1232
    %v1234 = vsub.f32 1.0, %v1233
    %v1235 = vmul.f32 %v1232, %v1234
    %v1236 = vadd.f32 %v1232, %v1235
    %vm1237 = vweird.f32 %v906
    %vm1238 = vweird.f32 %v1232
    %vm1239 = vmor %vm1237, %vm1238
    %v1240 = vsel %vm1239, %v1232, %v1236
    %v1241 = vand.u32 2147483647, %v906
    %vm1242 = vcmp.eq.f32.partialorder %v1241, 8.507059e+37
    %v1243 = vand.u32 %v906, 2147483648
    %v1244 = vor.u32 1.1754944e-38, %v1243
    %v1245 = vsel %vm1242, %v1244, %v1240
    %v1246 = vmul.f32 1.0, %v1245
    %v1247 = vrcp.pop %v907
    %v1248 = vmul.f32 %v907, %v1247
    %v1249 = vsub.f32 1.0, %v1248
    %v1250 = vmul.f32 %v1247, %v1249
    %v1251 = vadd.f32 %v1247, %v1250
    %vm1252 = vweird.f32 %v907
    %vm1253 = vweird.f32 %v1247
    %vm1254 = vmor %vm1252, %vm1253
    %v1255 = vsel %vm1254, %v1247, %v1251
    %v1256 = vand.u32 2147483647, %v907
    %vm1257 = vcmp.eq.f32.partialorder %v1256, 8.507059e+37
    %v1258 = vand.u32 %v907, 2147483648
    %v1259 = vor.u32 1.1754944e-38, %v1258
    %v1260 = vsel %vm1257, %v1259, %v1255
    %v1261 = vmul.f32 1.0, %v1260
    %v1262 = vrcp.pop %v908
    %v1263 = vmul.f32 %v908, %v1262
    %v1264 = vsub.f32 1.0, %v1263
    %v1265 = vmul.f32 %v1262, %v1264
    %v1266 = vadd.f32 %v1262, %v1265
    %vm1267 = vweird.f32 %v908
    %vm1268 = vweird.f32 %v1262
    %vm1269 = vmor %vm1267, %vm1268
    %v1270 = vsel %vm1269, %v1262, %v1266
    %v1271 = vand.u32 2147483647, %v908
    %vm1272 = vcmp.eq.f32.partialorder %v1271, 8.507059e+37
    %v1273 = vand.u32 %v908, 2147483648
    %v1274 = vor.u32 1.1754944e-38, %v1273
    %v1275 = vsel %vm1272, %v1274, %v1270
    %v1276 = vmul.f32 1.0, %v1275
    %v1277 = vrcp.pop %v909
    %v1278 = vmul.f32 %v909, %v1277
    %v1279 = vsub.f32 1.0, %v1278
    %v1280 = vmul.f32 %v1277, %v1279
    %v1281 = vadd.f32 %v1277, %v1280
    %vm1282 = vweird.f32 %v909
    %vm1283 = vweird.f32 %v1277
    %vm1284 = vmor %vm1282, %vm1283
    %v1285 = vsel %vm1284, %v1277, %v1281
    %v1286 = vand.u32 2147483647, %v909
    %vm1287 = vcmp.eq.f32.partialorder %v1286, 8.507059e+37
    %v1288 = vand.u32 %v909, 2147483648
    %v1289 = vor.u32 1.1754944e-38, %v1288
    %v1290 = vsel %vm1287, %v1289, %v1285
    %v1291 = vmul.f32 1.0, %v1290
    %v1292 = vrcp.pop %v910
    %v1293 = vmul.f32 %v910, %v1292
    %v1294 = vsub.f32 1.0, %v1293
    %v1295 = vmul.f32 %v1292, %v1294
    %v1296 = vadd.f32 %v1292, %v1295
    %vm1297 = vweird.f32 %v910
    %vm1298 = vweird.f32 %v1292
    %vm1299 = vmor %vm1297, %vm1298
    %v1300 = vsel %vm1299, %v1292, %v1296
    %v1301 = vand.u32 2147483647, %v910
    %vm1302 = vcmp.eq.f32.partialorder %v1301, 8.507059e+37
    %v1303 = vand.u32 %v910, 2147483648
    %v1304 = vor.u32 1.1754944e-38, %v1303
    %v1305 = vsel %vm1302, %v1304, %v1300
    %v1306 = vmul.f32 1.0, %v1305
    %v1307 = vrcp.pop %v911
    %v1308 = vmul.f32 %v911, %v1307
    %v1309 = vsub.f32 1.0, %v1308
    %v1310 = vmul.f32 %v1307, %v1309
    %v1311 = vadd.f32 %v1307, %v1310
    %vm1312 = vweird.f32 %v911
    %vm1313 = vweird.f32 %v1307
    %vm1314 = vmor %vm1312, %vm1313
    %v1315 = vsel %vm1314, %v1307, %v1311
    %v1316 = vand.u32 2147483647, %v911
    %vm1317 = vcmp.eq.f32.partialorder %v1316, 8.507059e+37
    %v1318 = vand.u32 %v911, 2147483648
    %v1319 = vor.u32 1.1754944e-38, %v1318
    %v1320 = vsel %vm1317, %v1319, %v1315
    %v1321 = vmul.f32 1.0, %v1320
    %v1322 = vrcp.pop %v912
    %v1323 = vmul.f32 %v912, %v1322
    %v1324 = vsub.f32 1.0, %v1323
    %v1325 = vmul.f32 %v1322, %v1324
    %v1326 = vadd.f32 %v1322, %v1325
    %vm1327 = vweird.f32 %v912
    %vm1328 = vweird.f32 %v1322
    %vm1329 = vmor %vm1327, %vm1328
    %v1330 = vsel %vm1329, %v1322, %v1326
    %v1331 = vand.u32 2147483647, %v912
    %vm1332 = vcmp.eq.f32.partialorder %v1331, 8.507059e+37
    %v1333 = vand.u32 %v912, 2147483648
    %v1334 = vor.u32 1.1754944e-38, %v1333
    %v1335 = vsel %vm1332, %v1334, %v1330
    %v1336 = vmul.f32 1.0, %v1335
    %v1337 = vrcp.pop %v913
    %v1338 = vmul.f32 %v913, %v1337
    %v1339 = vsub.f32 1.0, %v1338
    %v1340 = vmul.f32 %v1337, %v1339
    %v1341 = vadd.f32 %v1337, %v1340
    %vm1342 = vweird.f32 %v913
    %vm1343 = vweird.f32 %v1337
    %vm1344 = vmor %vm1342, %vm1343
    %v1345 = vsel %vm1344, %v1337, %v1341
    %v1346 = vand.u32 2147483647, %v913
    %vm1347 = vcmp.eq.f32.partialorder %v1346, 8.507059e+37
    %v1348 = vand.u32 %v913, 2147483648
    %v1349 = vor.u32 1.1754944e-38, %v1348
    %v1350 = vsel %vm1347, %v1349, %v1345
    %v1351 = vmul.f32 1.0, %v1350
    %v1352 = vrcp.pop %v914
    %v1353 = vmul.f32 %v914, %v1352
    %v1354 = vsub.f32 1.0, %v1353
    %v1355 = vmul.f32 %v1352, %v1354
    %v1356 = vadd.f32 %v1352, %v1355
    %vm1357 = vweird.f32 %v914
    %vm1358 = vweird.f32 %v1352
    %vm1359 = vmor %vm1357, %vm1358
    %v1360 = vsel %vm1359, %v1352, %v1356
    %v1361 = vand.u32 2147483647, %v914
    %vm1362 = vcmp.eq.f32.partialorder %v1361, 8.507059e+37
    %v1363 = vand.u32 %v914, 2147483648
    %v1364 = vor.u32 1.1754944e-38, %v1363
    %v1365 = vsel %vm1362, %v1364, %v1360
    %v1366 = vmul.f32 1.0, %v1365
    %v1367 = vrcp.pop %v915
    %v1368 = vmul.f32 %v915, %v1367
    %v1369 = vsub.f32 1.0, %v1368
    %v1370 = vmul.f32 %v1367, %v1369
    %v1371 = vadd.f32 %v1367, %v1370
    %vm1372 = vweird.f32 %v915
    %vm1373 = vweird.f32 %v1367
    %vm1374 = vmor %vm1372, %vm1373
    %v1375 = vsel %vm1374, %v1367, %v1371
    %v1376 = vand.u32 2147483647, %v915
    %vm1377 = vcmp.eq.f32.partialorder %v1376, 8.507059e+37
    %v1378 = vand.u32 %v915, 2147483648
    %v1379 = vor.u32 1.1754944e-38, %v1378
    %v1380 = vsel %vm1377, %v1379, %v1375
    %v1381 = vmul.f32 1.0, %v1380
    %v1382 = vrcp.pop %v916
    %v1383 = vmul.f32 %v916, %v1382
    %v1384 = vsub.f32 1.0, %v1383
    %v1385 = vmul.f32 %v1382, %v1384
    %v1386 = vadd.f32 %v1382, %v1385
    %vm1387 = vweird.f32 %v916
    %vm1388 = vweird.f32 %v1382
    %vm1389 = vmor %vm1387, %vm1388
    %v1390 = vsel %vm1389, %v1382, %v1386
    %v1391 = vand.u32 2147483647, %v916
    %vm1392 = vcmp.eq.f32.partialorder %v1391, 8.507059e+37
    %v1393 = vand.u32 %v916, 2147483648
    %v1394 = vor.u32 1.1754944e-38, %v1393
    %v1395 = vsel %vm1392, %v1394, %v1390
    %v1396 = vmul.f32 1.0, %v1395
    %v1397 = vpack.c.bf16 %v946, %v931
    %v1398 = vpack.c.bf16 %v976, %v961
    %v1399 = vpack.c.bf16 %v1006, %v991
    %v1400 = vpack.c.bf16 %v1036, %v1021
    %v1401 = vpack.c.bf16 %v1066, %v1051
    %v1402 = vpack.c.bf16 %v1096, %v1081
    %v1403 = vpack.c.bf16 %v1126, %v1111
    %v1404 = vpack.c.bf16 %v1156, %v1141
    %v1405 = vpack.c.bf16 %v1186, %v1171
    %v1406 = vpack.c.bf16 %v1216, %v1201
    %v1407 = vpack.c.bf16 %v1246, %v1231
    %v1408 = vpack.c.bf16 %v1276, %v1261
    %v1409 = vpack.c.bf16 %v1306, %v1291
    %v1410 = vpack.c.bf16 %v1336, %v1321
    %v1411 = vpack.c.bf16 %v1366, %v1351
    %v1412 = vpack.c.bf16 %v1396, %v1381
    %1413 = vst [vmem:[#allocation7] sm:$0xff] %v1397
    %1414 = vst [vmem:[#allocation7 + $0x8] sm:$0xff] %v1398
    %1415 = vst [vmem:[#allocation7 + $0x10] sm:$0xff] %v1399
    %1416 = vst [vmem:[#allocation7 + $0x18] sm:$0xff] %v1400
    %1417 = vst [vmem:[#allocation7 + $0x20] sm:$0xff] %v1401
    %1418 = vst [vmem:[#allocation7 + $0x28] sm:$0xff] %v1402
    %1419 = vst [vmem:[#allocation7 + $0x30] sm:$0xff] %v1403
    %1420 = vst [vmem:[#allocation7 + $0x38] sm:$0xff] %v1404
    %1421 = vst [vmem:[#allocation7 + $0x40] sm:$0xff] %v1405
    %1422 = vst [vmem:[#allocation7 + $0x48] sm:$0xff] %v1406
    %1423 = vst [vmem:[#allocation7 + $0x50] sm:$0xff] %v1407
    %1424 = vst [vmem:[#allocation7 + $0x58] sm:$0xff] %v1408
    %1425 = vst [vmem:[#allocation7 + $0x60] sm:$0xff] %v1409
    %1426 = vst [vmem:[#allocation7 + $0x68] sm:$0xff] %v1410
    %1427 = vst [vmem:[#allocation7 + $0x70] sm:$0xff] %v1411
    %1428 = vst [vmem:[#allocation7 + $0x78] sm:$0xff] %v1412
    // Predicated region
    $region46: #{tpu_custom_call.1} parent=1 // pred_check
      _
    $region47: #{tpu_custom_call.1} parent=1 // pred_check_branch
      %1430 = sbr.rel (0) target = $region49
    $region48: #{tpu_custom_call.1} parent=1 // pred_region
      %1432 = vsyncadd [#allocation4], 0
      %s1433 = sshll.u32 [#allocation7], 4
      %s1434 = int_to_ptr.vmem [resolvable:$true] %s1433
      %s1435 = sshll.u32 %s9, 4
      %s1436 = int_to_ptr.hbm [resolvable:$true] %s1435
      %1441 = dma.vmem_to_hbm [thread:$0]  %s1434, 2048, %s1436, [#allocation4], 128, 128, 8
    $region49: #{tpu_custom_call.1} parent=1 // pred_fallthru
      _
    // Predicated region
    $region50: #{tpu_custom_call.1} parent=1 // pred_check
      _
    $region51: #{tpu_custom_call.1} parent=1 // pred_check_branch
      %1443 = sbr.rel (0) target = $region53
    $region52: #{tpu_custom_call.1} parent=1 // pred_region
      %1445 = dma.done [#allocation4], 2048
    $region53: #{tpu_custom_call.1} parent=1 // pred_fallthru
      _
    %1446 = vsyncpa [#allocation3], 1
    %1447 = vsyncpa [#allocation4], 1
    %1448 = vsyncpa [#allocation5], 1

</llo_original>
